<compile_context>
chip_gen: v7x
topology: tpu7x:2x2x1
jax: 0.10.0
libtpu: 0.0.40
codegen_flags: <defaults>
</compile_context>

<pallas_src>
import functools

import jax
import jax.numpy as jnp
from jax.experimental import pallas as pl
from jax.experimental.pallas import tpu as pltpu


def _round_up(x, m):
    return ((x + m - 1) // m) * m


# ---------------------------------------------------------------------------
# Pallas kernel: hoisted input projection + fused fwd/bwd recurrence + FC.
# Everything is VMEM-resident (single invocation, no grid, no scratch refs) —
# the problem is a tiny latency chain, so tiling/pipelining would be overhead.
# ---------------------------------------------------------------------------
def _bilstm_fc_kernel(x_ref,      # [T*Bp, E]   bf16 embeddings, time-major, batch padded
                      win_ref,    # [E, 4*Hp]   bf16 dense input-projection weights
                      wrec_ref,   # [Hp, 4*Hp]  bf16 block-diagonal recurrent weights
                      b_ref,      # [1, 4*Hp]   f32 fused (b_ih + b_hh) biases
                      wfc_ref,    # [Hp, 1]     f32
                      bfc_ref,    # [1, 1]      f32
                      out_ref,    # [Bp, 1]     f32
                      *, T, Bp, H):
    Hp = wrec_ref.shape[0]        # padded fused state width (>= 2H, multiple of 128)
    G = 4 * Hp                    # gate columns: [i | f | o | g], each Hp lanes wide

    # ---- Hoisted input projection for ALL timesteps and BOTH directions:
    #      one well-shaped bf16 MXU push, f32 accumulation, bias folded in once.
    #      Row t*Bp+b holds the fwd pre-gates of emb[t, b] in the fwd lanes of each
    #      gate block and the bwd pre-gates of emb[t, b] in the bwd lanes.
    pre_gates = (jnp.dot(x_ref[...], win_ref[...],
                         preferred_element_type=jnp.float32) + b_ref[...])   # [T*Bp, G]

    w_rec = wrec_ref[...]         # bf16 value, reused every step

    # Loop-invariant fwd/bwd merge mask (hoisted once): lanes [0, H) of each gate
    # block come from the forward-time row, lanes [H, 2H) from the reversed-time
    # row; padding lanes [2H, Hp) are zero either way.
    lane = jax.lax.broadcasted_iota(jnp.int32, (Bp, G), 1)
    fwd_mask = (lane % Hp) < H

    # PyTorch default h0 = c0 = 0.  State layout: [h_f | h_b | zero pad].
    h = jnp.zeros((Bp, Hp), jnp.float32)
    c = jnp.zeros((Bp, Hp), jnp.float32)

    # ---- Fully unrolled recurrence (T small & static): one bf16 matmul per step.
    # TODO(synk): for large T switch to lax.fori_loop with pre_gates staged in a
    # VMEM scratch ref (indexed via pl.ds(pl.multiple_of(t*Bp, 8), Bp)) to bound
    # live ranges; at T=8 the unroll is the better choice.
    for t in range(T):
        pre_f = pre_gates[t * Bp:(t + 1) * Bp, :]              # fwd reads emb[t]
        pre_b = pre_gates[(T - 1 - t) * Bp:(T - t) * Bp, :]     # bwd reads emb[T-1-t]
        pre = jnp.where(fwd_mask, pre_f, pre_b)                 # off the h->h chain

        gates = pre + jnp.dot(h.astype(jnp.bfloat16), w_rec,
                              preferred_element_type=jnp.float32)   # [Bp, G] f32

        sig = jax.nn.sigmoid(gates[:, :3 * Hp])                 # only i / f / o blocks
        i = sig[:, 0 * Hp:1 * Hp]
        f = sig[:, 1 * Hp:2 * Hp]
        o = sig[:, 2 * Hp:3 * Hp]
        g = jnp.tanh(gates[:, 3 * Hp:])                         # only the g block

        c = f * c + i * g
        h = o * jnp.tanh(c)

    # ---- h == [h_f | h_b | 0] == cat([hidden[-2], hidden[-1]], dim=1) zero-padded.
    s = jnp.dot(h, wfc_ref[...], preferred_element_type=jnp.float32) + bfc_ref[...]
    out_ref[...] = jax.nn.sigmoid(s).astype(out_ref.dtype)


def bilstm_fc_pallas(emb_seq, fp):
    """emb_seq: [T, B, E] float32, fp: fused kernel params -> [B, 1] float32."""
    T, B, E = emb_seq.shape
    H = fp["H"]
    Bp = _round_up(B, 8)                                   # 8-sublane tile alignment

    emb_p = jnp.zeros((T, Bp, E), jnp.float32).at[:, :B, :].set(emb_seq)
    x = emb_p.reshape(T * Bp, E).astype(jnp.bfloat16)      # bf16 MXU operand

    vmem = pl.BlockSpec(memory_space=pltpu.MemorySpace.VMEM)
    out_p = pl.pallas_call(
        functools.partial(_bilstm_fc_kernel, T=T, Bp=Bp, H=H),
        out_shape=jax.ShapeDtypeStruct((Bp, 1), jnp.float32),
        in_specs=[vmem] * 6,
        out_specs=vmem,
        compiler_params=pltpu.CompilerParams(vmem_limit_bytes=32 * 1024 * 1024),
    )(x, fp["w_in"], fp["w_rec"], fp["b"], fp["wfc"], fp["bfc"])
    return out_p[:B]


# ---------------------------------------------------------------------------
# Parameter init (PyTorch-layout) and one-time fusion into the kernel layout.
# ---------------------------------------------------------------------------
def init_params(key, vocab_size, embedding_dim, hidden_dim):
    ks = jax.random.split(key, 12)
    E, H = embedding_dim, hidden_dim
    lstm_bound = 1.0 / jnp.sqrt(H)
    fc_bound = 1.0 / jnp.sqrt(2.0 * H)

    def u(k, shape, bound):
        return jax.random.uniform(k, shape, jnp.float32, -bound, bound)

    return {
        # nn.Embedding: N(0, 1)
        "embedding": jax.random.normal(ks[0], (vocab_size, E), jnp.float32),
        # nn.LSTM bidirectional, per direction: W_ih [4H,E], W_hh [4H,H], b_ih, b_hh [4H]
        "wih_f": u(ks[1], (4 * H, E), lstm_bound),
        "whh_f": u(ks[2], (4 * H, H), lstm_bound),
        "b_ih_f": u(ks[3], (4 * H,), lstm_bound),
        "b_hh_f": u(ks[4], (4 * H,), lstm_bound),
        "wih_b": u(ks[5], (4 * H, E), lstm_bound),
        "whh_b": u(ks[6], (4 * H, H), lstm_bound),
        "b_ih_b": u(ks[7], (4 * H,), lstm_bound),
        "b_hh_b": u(ks[8], (4 * H,), lstm_bound),
        # nn.Linear(2H, 1)
        "wfc": u(ks[9], (1, 2 * H), fc_bound),
        "bfc": u(ks[10], (1,), fc_bound),
    }


def fuse_params(p):
    """Build the fused / padded / pre-transposed tensors the kernel consumes.

    Gate-column layout (sigmoid gates first, tanh gate last), each block Hp lanes:
        [ i | f | o | g ],  block = [fwd (H) | bwd (H) | zero pad (Hp - 2H)]
    State layout (h, c): [h_f (H) | h_b (H) | zero pad], Hp = round_up(2H, 128).
    Weights feeding the MXU are stored bf16; biases / FC stay f32.
    """
    H = p["whh_f"].shape[1]
    E = p["wih_f"].shape[1]
    Hp = _round_up(2 * H, 128)
    gate_order = (0, 1, 3, 2)      # PyTorch row blocks are (i, f, g, o); we want (i, f, o, g)

    w_in = jnp.zeros((E, 4 * Hp), jnp.float32)
    w_rec = jnp.zeros((Hp, 4 * Hp), jnp.float32)
    b = jnp.zeros((1, 4 * Hp), jnp.float32)
    b_f = p["b_ih_f"] + p["b_hh_f"]
    b_b = p["b_ih_b"] + p["b_hh_b"]

    for s, k in enumerate(gate_order):
        rows = slice(k * H, (k + 1) * H)
        cf = slice(s * Hp, s * Hp + H)              # fwd lanes of this gate block
        cb = slice(s * Hp + H, s * Hp + 2 * H)      # bwd lanes of this gate block
        w_in = w_in.at[:, cf].set(p["wih_f"][rows, :].T)
        w_in = w_in.at[:, cb].set(p["wih_b"][rows, :].T)
        w_rec = w_rec.at[0:H, cf].set(p["whh_f"][rows, :].T)
        w_rec = w_rec.at[H:2 * H, cb].set(p["whh_b"][rows, :].T)
        b = b.at[0, cf].set(b_f[rows])
        b = b.at[0, cb].set(b_b[rows])

    wfc = jnp.zeros((Hp, 1), jnp.float32).at[0:2 * H, :].set(p["wfc"].T)

    return {
        "H": int(H),
        "w_in": w_in.astype(jnp.bfloat16),
        "w_rec": w_rec.astype(jnp.bfloat16),
        "b": b,
        "wfc": wfc,
        "bfc": p["bfc"].reshape(1, 1),
    }


def forward(params, fused, x_tokens):
    """x_tokens: [seq_len, batch, 1] int32 token ids -> [batch, 1] float32."""
    emb = params["embedding"][x_tokens[:, :, 0]]   # embedding lookup + squeeze(2)
    # nn.Dropout(0.5) is identity in eval mode.
    return bilstm_fc_pallas(emb.astype(jnp.float32), fused)


if __name__ == "__main__":
    vocab_size = 50
    embedding_dim = 32
    hidden_dim = 32
    seq_len = 8
    batch = 4

    key = jax.random.PRNGKey(0)
    pkey, xkey = jax.random.split(key)
    params = init_params(pkey, vocab_size, embedding_dim, hidden_dim)
    fused = fuse_params(params)

    x = jax.random.randint(xkey, (seq_len, batch, 1), 0, vocab_size, dtype=jnp.int32)

    out = forward(params, fused, x)
    out = jax.block_until_ready(out)
    assert out.shape == (batch, 1) and out.dtype == jnp.float32
    print("KERNEL_OK")
</pallas_src>

<mosaic_0001>
module attributes {stable_mosaic.version = 11 : i64} {
  func.func @_bilstm_fc_kernel(%arg0: memref<64x32xbf16, #tpu.memory_space<vmem>>, %arg1: memref<32x512xbf16, #tpu.memory_space<vmem>>, %arg2: memref<128x512xbf16, #tpu.memory_space<vmem>>, %arg3: memref<1x512xf32, #tpu.memory_space<vmem>>, %arg4: memref<128x1xf32, #tpu.memory_space<vmem>>, %arg5: memref<1x1xf32, #tpu.memory_space<vmem>>, %arg6: memref<8x1xf32, #tpu.memory_space<vmem>>) attributes {dimension_semantics = [], scalar_prefetch = 0 : i64, scratch_operands = 0 : i64, tpu.core_type = #tpu.core_type<tc>} {
    %c0 = arith.constant 0 : index
    %c0_0 = arith.constant 0 : index
    %0 = vector.load %arg0[%c0, %c0_0] : memref<64x32xbf16, #tpu.memory_space<vmem>>, vector<64x32xbf16>
    %c0_1 = arith.constant 0 : index
    %c0_2 = arith.constant 0 : index
    %1 = vector.load %arg1[%c0_1, %c0_2] : memref<32x512xbf16, #tpu.memory_space<vmem>>, vector<32x512xbf16>
    %cst = arith.constant dense<0.000000e+00> : vector<64x512xf32>
    %2 = tpu.matmul %0, %1, %cst {dimension_numbers = #tpu.dot_dimension_numbers<[1], [0], [0], [1], [0, 0, 1, 1], [], []>} : vector<64x32xbf16>, vector<32x512xbf16>, vector<64x512xf32> -> vector<64x512xf32>
    %c0_3 = arith.constant 0 : index
    %c0_4 = arith.constant 0 : index
    %3 = vector.load %arg3[%c0_3, %c0_4] : memref<1x512xf32, #tpu.memory_space<vmem>>, vector<1x512xf32>
    %4 = vector.broadcast %3 : vector<1x512xf32> to vector<64x512xf32>
    %5 = arith.addf %2, %4 : vector<64x512xf32>
    %c0_5 = arith.constant 0 : index
    %c0_6 = arith.constant 0 : index
    %6 = vector.load %arg2[%c0_5, %c0_6] : memref<128x512xbf16, #tpu.memory_space<vmem>>, vector<128x512xbf16>
    %7 = tpu.iota {dimensions = array<i32: 1>} : vector<8x512xi32>
    %c128_i32 = arith.constant 128 : i32
    %c0_i32 = arith.constant 0 : i32
    %8 = arith.cmpi eq, %c128_i32, %c0_i32 : i32
    %c1_i32 = arith.constant 1 : i32
    %9 = arith.select %8, %c1_i32, %c128_i32 : i32
    %10 = vector.broadcast %9 : i32 to vector<8x512xi32>
    %11 = arith.remsi %7, %10 : vector<8x512xi32>
    %c0_i32_7 = arith.constant 0 : i32
    %12 = vector.broadcast %c0_i32_7 : i32 to vector<8x512xi32>
    %13 = arith.cmpi ne, %11, %12 : vector<8x512xi32>
    %c0_i32_8 = arith.constant 0 : i32
    %14 = vector.broadcast %c0_i32_8 : i32 to vector<8x512xi32>
    %15 = arith.cmpi slt, %11, %14 : vector<8x512xi32>
    %c0_i32_9 = arith.constant 0 : i32
    %16 = arith.cmpi slt, %9, %c0_i32_9 : i32
    %17 = vector.broadcast %16 : i1 to vector<8x512xi1>
    %18 = vector.broadcast %17 : vector<8x512xi1> to vector<8x512xi1>
    %19 = arith.xori %15, %18 : vector<8x512xi1>
    %20 = arith.andi %19, %13 : vector<8x512xi1>
    %21 = vector.broadcast %9 : i32 to vector<8x512xi32>
    %22 = arith.addi %11, %21 : vector<8x512xi32>
    %23 = arith.select %20, %22, %11 : vector<8x512xi1>, vector<8x512xi32>
    %c32_i32 = arith.constant 32 : i32
    %24 = vector.broadcast %c32_i32 : i32 to vector<8x512xi32>
    %25 = arith.cmpi slt, %23, %24 : vector<8x512xi32>
    %cst_10 = arith.constant 0.000000e+00 : f32
    %26 = vector.broadcast %cst_10 : f32 to vector<8x128xf32>
    %cst_11 = arith.constant 0.000000e+00 : f32
    %27 = vector.broadcast %cst_11 : f32 to vector<8x128xf32>
    %28 = vector.extract_strided_slice %5 {offsets = [0, 0], sizes = [8, 512], strides = [1, 1]} : vector<64x512xf32> to vector<8x512xf32>
    %29 = vector.extract_strided_slice %5 {offsets = [56, 0], sizes = [8, 512], strides = [1, 1]} : vector<64x512xf32> to vector<8x512xf32>
    %30 = arith.select %25, %28, %29 : vector<8x512xi1>, vector<8x512xf32>
    %31 = arith.truncf %26 : vector<8x128xf32> to vector<8x128xbf16>
    %cst_12 = arith.constant dense<0.000000e+00> : vector<8x512xf32>
    %32 = tpu.matmul %31, %6, %cst_12 {dimension_numbers = #tpu.dot_dimension_numbers<[1], [0], [0], [1], [0, 0, 1, 1], [], []>} : vector<8x128xbf16>, vector<128x512xbf16>, vector<8x512xf32> -> vector<8x512xf32>
    %33 = arith.addf %30, %32 : vector<8x512xf32>
    %34 = vector.extract_strided_slice %33 {offsets = [0, 0], sizes = [8, 384], strides = [1, 1]} : vector<8x512xf32> to vector<8x384xf32>
    %35 = arith.negf %34 : vector<8x384xf32>
    %36 = math.exp %35 : vector<8x384xf32>
    %cst_13 = arith.constant 1.000000e+00 : f32
    %37 = vector.broadcast %cst_13 : f32 to vector<8x384xf32>
    %38 = arith.addf %37, %36 : vector<8x384xf32>
    %39 = arith.divf %37, %38 : vector<8x384xf32>
    %40 = vector.extract_strided_slice %39 {offsets = [0, 0], sizes = [8, 128], strides = [1, 1]} : vector<8x384xf32> to vector<8x128xf32>
    %41 = vector.extract_strided_slice %39 {offsets = [0, 128], sizes = [8, 128], strides = [1, 1]} : vector<8x384xf32> to vector<8x128xf32>
    %42 = vector.extract_strided_slice %39 {offsets = [0, 256], sizes = [8, 128], strides = [1, 1]} : vector<8x384xf32> to vector<8x128xf32>
    %43 = vector.extract_strided_slice %33 {offsets = [0, 384], sizes = [8, 128], strides = [1, 1]} : vector<8x512xf32> to vector<8x128xf32>
    %44 = math.tanh %43 : vector<8x128xf32>
    %45 = arith.mulf %41, %27 : vector<8x128xf32>
    %46 = arith.mulf %40, %44 : vector<8x128xf32>
    %47 = arith.addf %45, %46 : vector<8x128xf32>
    %48 = math.tanh %47 : vector<8x128xf32>
    %49 = arith.mulf %42, %48 : vector<8x128xf32>
    %50 = vector.extract_strided_slice %5 {offsets = [8, 0], sizes = [8, 512], strides = [1, 1]} : vector<64x512xf32> to vector<8x512xf32>
    %51 = vector.extract_strided_slice %5 {offsets = [48, 0], sizes = [8, 512], strides = [1, 1]} : vector<64x512xf32> to vector<8x512xf32>
    %52 = arith.select %25, %50, %51 : vector<8x512xi1>, vector<8x512xf32>
    %53 = arith.truncf %49 : vector<8x128xf32> to vector<8x128xbf16>
    %cst_14 = arith.constant dense<0.000000e+00> : vector<8x512xf32>
    %54 = tpu.matmul %53, %6, %cst_14 {dimension_numbers = #tpu.dot_dimension_numbers<[1], [0], [0], [1], [0, 0, 1, 1], [], []>} : vector<8x128xbf16>, vector<128x512xbf16>, vector<8x512xf32> -> vector<8x512xf32>
    %55 = arith.addf %52, %54 : vector<8x512xf32>
    %56 = vector.extract_strided_slice %55 {offsets = [0, 0], sizes = [8, 384], strides = [1, 1]} : vector<8x512xf32> to vector<8x384xf32>
    %57 = arith.negf %56 : vector<8x384xf32>
    %58 = math.exp %57 : vector<8x384xf32>
    %cst_15 = arith.constant 1.000000e+00 : f32
    %59 = vector.broadcast %cst_15 : f32 to vector<8x384xf32>
    %60 = arith.addf %59, %58 : vector<8x384xf32>
    %61 = arith.divf %59, %60 : vector<8x384xf32>
    %62 = vector.extract_strided_slice %61 {offsets = [0, 0], sizes = [8, 128], strides = [1, 1]} : vector<8x384xf32> to vector<8x128xf32>
    %63 = vector.extract_strided_slice %61 {offsets = [0, 128], sizes = [8, 128], strides = [1, 1]} : vector<8x384xf32> to vector<8x128xf32>
    %64 = vector.extract_strided_slice %61 {offsets = [0, 256], sizes = [8, 128], strides = [1, 1]} : vector<8x384xf32> to vector<8x128xf32>
    %65 = vector.extract_strided_slice %55 {offsets = [0, 384], sizes = [8, 128], strides = [1, 1]} : vector<8x512xf32> to vector<8x128xf32>
    %66 = math.tanh %65 : vector<8x128xf32>
    %67 = arith.mulf %63, %47 : vector<8x128xf32>
    %68 = arith.mulf %62, %66 : vector<8x128xf32>
    %69 = arith.addf %67, %68 : vector<8x128xf32>
    %70 = math.tanh %69 : vector<8x128xf32>
    %71 = arith.mulf %64, %70 : vector<8x128xf32>
    %72 = vector.extract_strided_slice %5 {offsets = [16, 0], sizes = [8, 512], strides = [1, 1]} : vector<64x512xf32> to vector<8x512xf32>
    %73 = vector.extract_strided_slice %5 {offsets = [40, 0], sizes = [8, 512], strides = [1, 1]} : vector<64x512xf32> to vector<8x512xf32>
    %74 = arith.select %25, %72, %73 : vector<8x512xi1>, vector<8x512xf32>
    %75 = arith.truncf %71 : vector<8x128xf32> to vector<8x128xbf16>
    %cst_16 = arith.constant dense<0.000000e+00> : vector<8x512xf32>
    %76 = tpu.matmul %75, %6, %cst_16 {dimension_numbers = #tpu.dot_dimension_numbers<[1], [0], [0], [1], [0, 0, 1, 1], [], []>} : vector<8x128xbf16>, vector<128x512xbf16>, vector<8x512xf32> -> vector<8x512xf32>
    %77 = arith.addf %74, %76 : vector<8x512xf32>
    %78 = vector.extract_strided_slice %77 {offsets = [0, 0], sizes = [8, 384], strides = [1, 1]} : vector<8x512xf32> to vector<8x384xf32>
    %79 = arith.negf %78 : vector<8x384xf32>
    %80 = math.exp %79 : vector<8x384xf32>
    %cst_17 = arith.constant 1.000000e+00 : f32
    %81 = vector.broadcast %cst_17 : f32 to vector<8x384xf32>
    %82 = arith.addf %81, %80 : vector<8x384xf32>
    %83 = arith.divf %81, %82 : vector<8x384xf32>
    %84 = vector.extract_strided_slice %83 {offsets = [0, 0], sizes = [8, 128], strides = [1, 1]} : vector<8x384xf32> to vector<8x128xf32>
    %85 = vector.extract_strided_slice %83 {offsets = [0, 128], sizes = [8, 128], strides = [1, 1]} : vector<8x384xf32> to vector<8x128xf32>
    %86 = vector.extract_strided_slice %83 {offsets = [0, 256], sizes = [8, 128], strides = [1, 1]} : vector<8x384xf32> to vector<8x128xf32>
    %87 = vector.extract_strided_slice %77 {offsets = [0, 384], sizes = [8, 128], strides = [1, 1]} : vector<8x512xf32> to vector<8x128xf32>
    %88 = math.tanh %87 : vector<8x128xf32>
    %89 = arith.mulf %85, %69 : vector<8x128xf32>
    %90 = arith.mulf %84, %88 : vector<8x128xf32>
    %91 = arith.addf %89, %90 : vector<8x128xf32>
    %92 = math.tanh %91 : vector<8x128xf32>
    %93 = arith.mulf %86, %92 : vector<8x128xf32>
    %94 = vector.extract_strided_slice %5 {offsets = [24, 0], sizes = [8, 512], strides = [1, 1]} : vector<64x512xf32> to vector<8x512xf32>
    %95 = vector.extract_strided_slice %5 {offsets = [32, 0], sizes = [8, 512], strides = [1, 1]} : vector<64x512xf32> to vector<8x512xf32>
    %96 = arith.select %25, %94, %95 : vector<8x512xi1>, vector<8x512xf32>
    %97 = arith.truncf %93 : vector<8x128xf32> to vector<8x128xbf16>
    %cst_18 = arith.constant dense<0.000000e+00> : vector<8x512xf32>
    %98 = tpu.matmul %97, %6, %cst_18 {dimension_numbers = #tpu.dot_dimension_numbers<[1], [0], [0], [1], [0, 0, 1, 1], [], []>} : vector<8x128xbf16>, vector<128x512xbf16>, vector<8x512xf32> -> vector<8x512xf32>
    %99 = arith.addf %96, %98 : vector<8x512xf32>
    %100 = vector.extract_strided_slice %99 {offsets = [0, 0], sizes = [8, 384], strides = [1, 1]} : vector<8x512xf32> to vector<8x384xf32>
    %101 = arith.negf %100 : vector<8x384xf32>
    %102 = math.exp %101 : vector<8x384xf32>
    %cst_19 = arith.constant 1.000000e+00 : f32
    %103 = vector.broadcast %cst_19 : f32 to vector<8x384xf32>
    %104 = arith.addf %103, %102 : vector<8x384xf32>
    %105 = arith.divf %103, %104 : vector<8x384xf32>
    %106 = vector.extract_strided_slice %105 {offsets = [0, 0], sizes = [8, 128], strides = [1, 1]} : vector<8x384xf32> to vector<8x128xf32>
    %107 = vector.extract_strided_slice %105 {offsets = [0, 128], sizes = [8, 128], strides = [1, 1]} : vector<8x384xf32> to vector<8x128xf32>
    %108 = vector.extract_strided_slice %105 {offsets = [0, 256], sizes = [8, 128], strides = [1, 1]} : vector<8x384xf32> to vector<8x128xf32>
    %109 = vector.extract_strided_slice %99 {offsets = [0, 384], sizes = [8, 128], strides = [1, 1]} : vector<8x512xf32> to vector<8x128xf32>
    %110 = math.tanh %109 : vector<8x128xf32>
    %111 = arith.mulf %107, %91 : vector<8x128xf32>
    %112 = arith.mulf %106, %110 : vector<8x128xf32>
    %113 = arith.addf %111, %112 : vector<8x128xf32>
    %114 = math.tanh %113 : vector<8x128xf32>
    %115 = arith.mulf %108, %114 : vector<8x128xf32>
    %116 = vector.extract_strided_slice %5 {offsets = [32, 0], sizes = [8, 512], strides = [1, 1]} : vector<64x512xf32> to vector<8x512xf32>
    %117 = vector.extract_strided_slice %5 {offsets = [24, 0], sizes = [8, 512], strides = [1, 1]} : vector<64x512xf32> to vector<8x512xf32>
    %118 = arith.select %25, %116, %117 : vector<8x512xi1>, vector<8x512xf32>
    %119 = arith.truncf %115 : vector<8x128xf32> to vector<8x128xbf16>
    %cst_20 = arith.constant dense<0.000000e+00> : vector<8x512xf32>
    %120 = tpu.matmul %119, %6, %cst_20 {dimension_numbers = #tpu.dot_dimension_numbers<[1], [0], [0], [1], [0, 0, 1, 1], [], []>} : vector<8x128xbf16>, vector<128x512xbf16>, vector<8x512xf32> -> vector<8x512xf32>
    %121 = arith.addf %118, %120 : vector<8x512xf32>
    %122 = vector.extract_strided_slice %121 {offsets = [0, 0], sizes = [8, 384], strides = [1, 1]} : vector<8x512xf32> to vector<8x384xf32>
    %123 = arith.negf %122 : vector<8x384xf32>
    %124 = math.exp %123 : vector<8x384xf32>
    %cst_21 = arith.constant 1.000000e+00 : f32
    %125 = vector.broadcast %cst_21 : f32 to vector<8x384xf32>
    %126 = arith.addf %125, %124 : vector<8x384xf32>
    %127 = arith.divf %125, %126 : vector<8x384xf32>
    %128 = vector.extract_strided_slice %127 {offsets = [0, 0], sizes = [8, 128], strides = [1, 1]} : vector<8x384xf32> to vector<8x128xf32>
    %129 = vector.extract_strided_slice %127 {offsets = [0, 128], sizes = [8, 128], strides = [1, 1]} : vector<8x384xf32> to vector<8x128xf32>
    %130 = vector.extract_strided_slice %127 {offsets = [0, 256], sizes = [8, 128], strides = [1, 1]} : vector<8x384xf32> to vector<8x128xf32>
    %131 = vector.extract_strided_slice %121 {offsets = [0, 384], sizes = [8, 128], strides = [1, 1]} : vector<8x512xf32> to vector<8x128xf32>
    %132 = math.tanh %131 : vector<8x128xf32>
    %133 = arith.mulf %129, %113 : vector<8x128xf32>
    %134 = arith.mulf %128, %132 : vector<8x128xf32>
    %135 = arith.addf %133, %134 : vector<8x128xf32>
    %136 = math.tanh %135 : vector<8x128xf32>
    %137 = arith.mulf %130, %136 : vector<8x128xf32>
    %138 = vector.extract_strided_slice %5 {offsets = [40, 0], sizes = [8, 512], strides = [1, 1]} : vector<64x512xf32> to vector<8x512xf32>
    %139 = vector.extract_strided_slice %5 {offsets = [16, 0], sizes = [8, 512], strides = [1, 1]} : vector<64x512xf32> to vector<8x512xf32>
    %140 = arith.select %25, %138, %139 : vector<8x512xi1>, vector<8x512xf32>
    %141 = arith.truncf %137 : vector<8x128xf32> to vector<8x128xbf16>
    %cst_22 = arith.constant dense<0.000000e+00> : vector<8x512xf32>
    %142 = tpu.matmul %141, %6, %cst_22 {dimension_numbers = #tpu.dot_dimension_numbers<[1], [0], [0], [1], [0, 0, 1, 1], [], []>} : vector<8x128xbf16>, vector<128x512xbf16>, vector<8x512xf32> -> vector<8x512xf32>
    %143 = arith.addf %140, %142 : vector<8x512xf32>
    %144 = vector.extract_strided_slice %143 {offsets = [0, 0], sizes = [8, 384], strides = [1, 1]} : vector<8x512xf32> to vector<8x384xf32>
    %145 = arith.negf %144 : vector<8x384xf32>
    %146 = math.exp %145 : vector<8x384xf32>
    %cst_23 = arith.constant 1.000000e+00 : f32
    %147 = vector.broadcast %cst_23 : f32 to vector<8x384xf32>
    %148 = arith.addf %147, %146 : vector<8x384xf32>
    %149 = arith.divf %147, %148 : vector<8x384xf32>
    %150 = vector.extract_strided_slice %149 {offsets = [0, 0], sizes = [8, 128], strides = [1, 1]} : vector<8x384xf32> to vector<8x128xf32>
    %151 = vector.extract_strided_slice %149 {offsets = [0, 128], sizes = [8, 128], strides = [1, 1]} : vector<8x384xf32> to vector<8x128xf32>
    %152 = vector.extract_strided_slice %149 {offsets = [0, 256], sizes = [8, 128], strides = [1, 1]} : vector<8x384xf32> to vector<8x128xf32>
    %153 = vector.extract_strided_slice %143 {offsets = [0, 384], sizes = [8, 128], strides = [1, 1]} : vector<8x512xf32> to vector<8x128xf32>
    %154 = math.tanh %153 : vector<8x128xf32>
    %155 = arith.mulf %151, %135 : vector<8x128xf32>
    %156 = arith.mulf %150, %154 : vector<8x128xf32>
    %157 = arith.addf %155, %156 : vector<8x128xf32>
    %158 = math.tanh %157 : vector<8x128xf32>
    %159 = arith.mulf %152, %158 : vector<8x128xf32>
    %160 = vector.extract_strided_slice %5 {offsets = [48, 0], sizes = [8, 512], strides = [1, 1]} : vector<64x512xf32> to vector<8x512xf32>
    %161 = vector.extract_strided_slice %5 {offsets = [8, 0], sizes = [8, 512], strides = [1, 1]} : vector<64x512xf32> to vector<8x512xf32>
    %162 = arith.select %25, %160, %161 : vector<8x512xi1>, vector<8x512xf32>
    %163 = arith.truncf %159 : vector<8x128xf32> to vector<8x128xbf16>
    %cst_24 = arith.constant dense<0.000000e+00> : vector<8x512xf32>
    %164 = tpu.matmul %163, %6, %cst_24 {dimension_numbers = #tpu.dot_dimension_numbers<[1], [0], [0], [1], [0, 0, 1, 1], [], []>} : vector<8x128xbf16>, vector<128x512xbf16>, vector<8x512xf32> -> vector<8x512xf32>
    %165 = arith.addf %162, %164 : vector<8x512xf32>
    %166 = vector.extract_strided_slice %165 {offsets = [0, 0], sizes = [8, 384], strides = [1, 1]} : vector<8x512xf32> to vector<8x384xf32>
    %167 = arith.negf %166 : vector<8x384xf32>
    %168 = math.exp %167 : vector<8x384xf32>
    %cst_25 = arith.constant 1.000000e+00 : f32
    %169 = vector.broadcast %cst_25 : f32 to vector<8x384xf32>
    %170 = arith.addf %169, %168 : vector<8x384xf32>
    %171 = arith.divf %169, %170 : vector<8x384xf32>
    %172 = vector.extract_strided_slice %171 {offsets = [0, 0], sizes = [8, 128], strides = [1, 1]} : vector<8x384xf32> to vector<8x128xf32>
    %173 = vector.extract_strided_slice %171 {offsets = [0, 128], sizes = [8, 128], strides = [1, 1]} : vector<8x384xf32> to vector<8x128xf32>
    %174 = vector.extract_strided_slice %171 {offsets = [0, 256], sizes = [8, 128], strides = [1, 1]} : vector<8x384xf32> to vector<8x128xf32>
    %175 = vector.extract_strided_slice %165 {offsets = [0, 384], sizes = [8, 128], strides = [1, 1]} : vector<8x512xf32> to vector<8x128xf32>
    %176 = math.tanh %175 : vector<8x128xf32>
    %177 = arith.mulf %173, %157 : vector<8x128xf32>
    %178 = arith.mulf %172, %176 : vector<8x128xf32>
    %179 = arith.addf %177, %178 : vector<8x128xf32>
    %180 = math.tanh %179 : vector<8x128xf32>
    %181 = arith.mulf %174, %180 : vector<8x128xf32>
    %182 = vector.extract_strided_slice %5 {offsets = [56, 0], sizes = [8, 512], strides = [1, 1]} : vector<64x512xf32> to vector<8x512xf32>
    %183 = vector.extract_strided_slice %5 {offsets = [0, 0], sizes = [8, 512], strides = [1, 1]} : vector<64x512xf32> to vector<8x512xf32>
    %184 = arith.select %25, %182, %183 : vector<8x512xi1>, vector<8x512xf32>
    %185 = arith.truncf %181 : vector<8x128xf32> to vector<8x128xbf16>
    %cst_26 = arith.constant dense<0.000000e+00> : vector<8x512xf32>
    %186 = tpu.matmul %185, %6, %cst_26 {dimension_numbers = #tpu.dot_dimension_numbers<[1], [0], [0], [1], [0, 0, 1, 1], [], []>} : vector<8x128xbf16>, vector<128x512xbf16>, vector<8x512xf32> -> vector<8x512xf32>
    %187 = arith.addf %184, %186 : vector<8x512xf32>
    %188 = vector.extract_strided_slice %187 {offsets = [0, 0], sizes = [8, 384], strides = [1, 1]} : vector<8x512xf32> to vector<8x384xf32>
    %189 = arith.negf %188 : vector<8x384xf32>
    %190 = math.exp %189 : vector<8x384xf32>
    %cst_27 = arith.constant 1.000000e+00 : f32
    %191 = vector.broadcast %cst_27 : f32 to vector<8x384xf32>
    %192 = arith.addf %191, %190 : vector<8x384xf32>
    %193 = arith.divf %191, %192 : vector<8x384xf32>
    %194 = vector.extract_strided_slice %193 {offsets = [0, 0], sizes = [8, 128], strides = [1, 1]} : vector<8x384xf32> to vector<8x128xf32>
    %195 = vector.extract_strided_slice %193 {offsets = [0, 128], sizes = [8, 128], strides = [1, 1]} : vector<8x384xf32> to vector<8x128xf32>
    %196 = vector.extract_strided_slice %193 {offsets = [0, 256], sizes = [8, 128], strides = [1, 1]} : vector<8x384xf32> to vector<8x128xf32>
    %197 = vector.extract_strided_slice %187 {offsets = [0, 384], sizes = [8, 128], strides = [1, 1]} : vector<8x512xf32> to vector<8x128xf32>
    %198 = math.tanh %197 : vector<8x128xf32>
    %199 = arith.mulf %195, %179 : vector<8x128xf32>
    %200 = arith.mulf %194, %198 : vector<8x128xf32>
    %201 = arith.addf %199, %200 : vector<8x128xf32>
    %202 = math.tanh %201 : vector<8x128xf32>
    %203 = arith.mulf %196, %202 : vector<8x128xf32>
    %c0_28 = arith.constant 0 : index
    %c0_29 = arith.constant 0 : index
    %204 = vector.load %arg4[%c0_28, %c0_29] : memref<128x1xf32, #tpu.memory_space<vmem>>, vector<128x1xf32>
    %cst_30 = arith.constant dense<0.000000e+00> : vector<8x1xf32>
    %205 = tpu.matmul %203, %204, %cst_30 {dimension_numbers = #tpu.dot_dimension_numbers<[1], [0], [0], [1], [0, 0, 1, 1], [], []>} : vector<8x128xf32>, vector<128x1xf32>, vector<8x1xf32> -> vector<8x1xf32>
    %c0_31 = arith.constant 0 : index
    %c0_32 = arith.constant 0 : index
    %206 = vector.load %arg5[%c0_31, %c0_32] : memref<1x1xf32, #tpu.memory_space<vmem>>, vector<1x1xf32>
    %207 = vector.broadcast %206 : vector<1x1xf32> to vector<8x1xf32>
    %208 = arith.addf %205, %207 : vector<8x1xf32>
    %209 = arith.negf %208 : vector<8x1xf32>
    %210 = math.exp %209 : vector<8x1xf32>
    %cst_33 = arith.constant 1.000000e+00 : f32
    %211 = vector.broadcast %cst_33 : f32 to vector<8x1xf32>
    %212 = arith.addf %211, %210 : vector<8x1xf32>
    %213 = arith.divf %211, %212 : vector<8x1xf32>
    %c0_34 = arith.constant 0 : index
    %c0_35 = arith.constant 0 : index
    %214 = vector.load %arg6[%c0_34, %c0_35] : memref<8x1xf32, #tpu.memory_space<vmem>>, vector<8x1xf32>
    tpu.vector_store %arg6[%c0_34, %c0_35], %213 {strides = array<i32>} : memref<8x1xf32, #tpu.memory_space<vmem>>, vector<8x1xf32>,
    return
  }
}

</mosaic_0001>

<llo_original>
// kernel: tpu_custom_call.1
$region0: #{tpu_custom_call.1}
  #allocation0 [shape = 'u32[]', space=smem, size = 0x4, offset = 0x4, fixed_abs, tag = 'smem constant byte address 0x4 - core index']
  #allocation1 [shape = 'u32[144,128]{1,0:T(1,128)}', space=vmem, size = 0x12000, scoped, tag = 'internal scratch']
  #allocation2 [shape = 'f32[1,1]{1,0:T(1,128)S(1)}', space=vmem, size = 0x200, scoped, tag = 'scoped memory for tpu_custom_call.1']
  %s0 = inlined_call_operand.vmem [shape: bf16[64,32], index: 0, kind: input, shape index: {}]
  %s1 = inlined_call_operand.vmem [shape: bf16[32,512], index: 1, kind: input, shape index: {}]
  %s2 = inlined_call_operand.hbm [shape: bf16[128,512], index: 2, kind: input, shape index: {}]
  %s3 = inlined_call_operand.vmem [shape: f32[1,512], index: 3, kind: input, shape index: {}]
  %s4 = inlined_call_operand.vmem [shape: f32[128,1], index: 4, kind: input, shape index: {}]
  %s5 = inlined_call_operand.<no memory space> [shape: f32[1,1], index: 5, kind: input, shape index: {}]
  %s6 = inlined_call_operand.vmem [shape: f32[8,1], index: 6, kind: output, shape index: {}]
  %s7 = sld [smem:[#allocation0]]
  $region38: #{tpu_custom_call.1} parent=0
    _
  %s9 = ssub.s32 1, %s7
  %s10 = scalar_select 0, %s9, %s7
  %v11 = vstv %s5
  %12 = vst [vmem:[#allocation2] sm:$0x1] %v11
  $region1: #{tpu_custom_call.1} parent=0
    #allocation3 [shape = 'u8[131072]{0}', space=vmem, size = 0x20000, scoped, tag = 'input window, operand 2, single buffered']
    #allocation4 [shape = 's32[1]{0}', space=sflag, size = 0x4, scoped, tag = 'scoped memory for tpu_custom_call.1']
    %13 = vsyncpa [#allocation4], 0
    // Predicated region
    $region2: #{tpu_custom_call.1} parent=1 // pred_check
      _
    $region3: #{tpu_custom_call.1} parent=1 // pred_check_branch
      %15 = sbr.rel (0) target = $region5
    $region4: #{tpu_custom_call.1} parent=1 // pred_region
      _
    $region5: #{tpu_custom_call.1} parent=1 // pred_fallthru
      _
    // Predicated region
    $region6: #{tpu_custom_call.1} parent=1 // pred_check
      _
    $region7: #{tpu_custom_call.1} parent=1 // pred_check_branch
      %17 = sbr.rel (0) target = $region9
    $region8: #{tpu_custom_call.1} parent=1 // pred_region
      _
    $region9: #{tpu_custom_call.1} parent=1 // pred_fallthru
      _
    // Predicated region
    $region10: #{tpu_custom_call.1} parent=1 // pred_check
      _
    $region11: #{tpu_custom_call.1} parent=1 // pred_check_branch
      %19 = sbr.rel (0) target = $region13
    $region12: #{tpu_custom_call.1} parent=1 // pred_region
      %s21 = ssub.s32 4096, 4096
      %22 = vsyncadd [#allocation4], %s21
      %s23 = sshll.u32 [#allocation3], 4
      %s24 = int_to_ptr.vmem [resolvable:$true] %s23
      %29 = dma.hbm_to_vmem [thread:$0]  %s2, 4096, %s24, [#allocation4], 256, 256, 16
    $region13: #{tpu_custom_call.1} parent=1 // pred_fallthru
      _
    // Predicated region
    $region14: #{tpu_custom_call.1} parent=1 // pred_check
      _
    $region15: #{tpu_custom_call.1} parent=1 // pred_check_branch
      %31 = sbr.rel (0) target = $region17
    $region16: #{tpu_custom_call.1} parent=1 // pred_region
      _
    $region17: #{tpu_custom_call.1} parent=1 // pred_fallthru
      _
    // Predicated region
    $region18: #{tpu_custom_call.1} parent=1 // pred_check
      _
    $region19: #{tpu_custom_call.1} parent=1 // pred_check_branch
      %33 = sbr.rel (0) target = $region21
    $region20: #{tpu_custom_call.1} parent=1 // pred_region
      _
    $region21: #{tpu_custom_call.1} parent=1 // pred_fallthru
      _
    // Predicated region
    $region22: #{tpu_custom_call.1} parent=1 // pred_check
      _
    $region23: #{tpu_custom_call.1} parent=1 // pred_check_branch
      %35 = sbr.rel (0) target = $region25
    $region24: #{tpu_custom_call.1} parent=1 // pred_region
      _
    $region25: #{tpu_custom_call.1} parent=1 // pred_fallthru
      _
    // Predicated region
    $region26: #{tpu_custom_call.1} parent=1 // pred_check
      _
    $region27: #{tpu_custom_call.1} parent=1 // pred_check_branch
      %37 = sbr.rel (0) target = $region29
    $region28: #{tpu_custom_call.1} parent=1 // pred_region
      %38 = dma.done [#allocation4], 4096
    $region29: #{tpu_custom_call.1} parent=1 // pred_fallthru
      _
    %v40 = vld [vmem:[%s0] sm:$0xf]
    %v41 = vld [vmem:[%s0 + $0x4] sm:$0xf]
    %v42 = vld [vmem:[%s0 + $0x8] sm:$0xf]
    %v43 = vld [vmem:[%s0 + $0xc] sm:$0xf]
    %v44 = vld [vmem:[%s0 + $0x10] sm:$0xf]
    %v45 = vld [vmem:[%s0 + $0x14] sm:$0xf]
    %v46 = vld [vmem:[%s0 + $0x18] sm:$0xf]
    %v47 = vld [vmem:[%s0 + $0x1c] sm:$0xf]
    %v48 = vld [vmem:[%s1] sm:$0xff]
    %v49 = vld [vmem:[%s1 + $0x8] sm:$0xff]
    %v50 = vld [vmem:[%s1 + $0x10] sm:$0xff]
    %v51 = vld [vmem:[%s1 + $0x18] sm:$0xff]
    %v52 = vld [vmem:[%s1 + $0x20] sm:$0xff]
    %v53 = vld [vmem:[%s1 + $0x28] sm:$0xff]
    %v54 = vld [vmem:[%s1 + $0x30] sm:$0xff]
    %v55 = vld [vmem:[%s1 + $0x38] sm:$0xff]
    %v56 = vld [vmem:[%s3] sm:$0xf]
    %v58 = vlaneseq
    %v59 = vshrl.u32 %v58, 7
    %v60 = vsub.s32 0, %v59
    %v61 = vrot.slane %v56, %v60
    %v62 = vlaneseq
    %v63 = vshrl.u32 %v62, 7
    %v64 = vsub.s32 1, %v63
    %v65 = vrot.slane %v56, %v64
    %v66 = vlaneseq
    %v67 = vshrl.u32 %v66, 7
    %v68 = vsub.s32 2, %v67
    %v69 = vrot.slane %v56, %v68
    %v70 = vlaneseq
    %v71 = vshrl.u32 %v70, 7
    %v72 = vsub.s32 3, %v71
    %v73 = vrot.slane %v56, %v72
    %v86 = vunpack.c.l.b16 %v40
    %v87 = vunpack.c.l.b16 %v41
    %v88 = vunpack.c.l.b16 %v42
    %v89 = vunpack.c.l.b16 %v43
    %v90 = vunpack.c.l.b16 %v44
    %v91 = vunpack.c.l.b16 %v45
    %v92 = vunpack.c.l.b16 %v46
    %v93 = vunpack.c.l.b16 %v47
    %v94 = vpack.c.b16 %v87, %v86
    %v95 = vpack.c.b16 %v89, %v88
    %v96 = vpack.c.b16 %v91, %v90
    %v97 = vpack.c.b16 %v93, %v92
    %v106 = vunpack.c.l.b16 %v48
    %v107 = vunpack.c.h.b16 %v48
    %v108 = vunpack.c.l.b16 %v49
    %v109 = vunpack.c.h.b16 %v49
    %v110 = vunpack.c.l.b16 %v50
    %v111 = vunpack.c.h.b16 %v50
    %v112 = vunpack.c.l.b16 %v51
    %v113 = vunpack.c.h.b16 %v51
    %v114 = vunpack.c.l.b16 %v52
    %v115 = vunpack.c.h.b16 %v52
    %v116 = vunpack.c.l.b16 %v53
    %v117 = vunpack.c.h.b16 %v53
    %v118 = vunpack.c.l.b16 %v54
    %v119 = vunpack.c.h.b16 %v54
    %v120 = vunpack.c.l.b16 %v55
    %v121 = vunpack.c.h.b16 %v55
    %v122 = vpack.c.b16 %v110, %v106
    %v123 = vpack.c.b16 %v111, %v107
    %v124 = vpack.c.b16 %v112, %v108
    %v125 = vpack.c.b16 %v113, %v109
    %v126 = vpack.c.b16 %v118, %v114
    %v127 = vpack.c.b16 %v119, %v115
    %v128 = vpack.c.b16 %v120, %v116
    %v129 = vpack.c.b16 %v121, %v117
    %vm138 = vcmask 261120
    %v140 = vsel %vm138, %v94, 0
    %v143 = vsel %vm138, %v95, 0
    %v146 = vsel %vm138, %v96, 0
    %v149 = vsel %vm138, %v97, 0
    %151 = vmatprep.subr.bf16.mxu0 %v123
    %152 = vmatpush1.bf16.msra.mxu0 %v122
    %153 = vmatprep.subr.bf16.mxu0 %v127
    %154 = vmatpush1.bf16.msra.mxu0 %v126
    %155 = vmatprep.subr.bf16.mxu0 0
    %156 = vmatpush1.bf16.msra.mxu0 0
    %157 = vmatprep.subr.bf16.mxu0 0
    %158 = vmatpush1.bf16.msra.mxu0 0
    %159 = vmatprep.subr.bf16.mxu0 0
    %160 = vmatpush1.bf16.msra.mxu0 0
    %161 = vmatprep.subr.bf16.mxu0 0
    %162 = vmatpush1.bf16.msra.mxu0 0
    %163 = vmatprep.subr.bf16.mxu0 0
    %164 = vmatpush1.bf16.msra.mxu0 0
    %165 = vmatprep.subr.bf16.mxu0 0
    %166 = vmatpush1.bf16.msra.mxu0 0
    %167 = vmatprep.subr.bf16.mxu0 0
    %168 = vmatpush1.bf16.msra.mxu0 0
    %169 = vmatprep.subr.bf16.mxu0 0
    %170 = vmatpush1.bf16.msra.mxu0 0
    %171 = vmatprep.subr.bf16.mxu0 0
    %172 = vmatpush1.bf16.msra.mxu0 0
    %173 = vmatprep.subr.bf16.mxu0 0
    %174 = vmatpush1.bf16.msra.mxu0 0
    %175 = vmatprep.subr.bf16.mxu0 0
    %176 = vmatpush1.bf16.msra.mxu0 0
    %177 = vmatprep.subr.bf16.mxu0 0
    %178 = vmatpush1.bf16.msra.mxu0 0
    %179 = vmatprep.subr.bf16.mxu0 0
    %180 = vmatpush1.bf16.msra.mxu0 0
    %181 = vmatprep.subr.bf16.mxu0 0
    %182 = vmatpush1.bf16.msra.mxu0 0
    %183 = vmatprep.mubr.bf16.mxu0 0
    %184 = vmatmul.mubr.bf16.gmra.mrb[0].mxu0 %v140
    %v185 = vpop.f32.mrb[0].mxu0
    %v186 = vadd.f32 %v61, %v185
    %v187 = vpop.f32.mrb[0].mxu0
    %v188 = vadd.f32 %v65, %v187
    %v189 = vpop.f32.mrb[0].mxu0
    %v190 = vadd.f32 %v61, %v189
    %v191 = vpop.f32.mrb[0].mxu0
    %v192 = vadd.f32 %v65, %v191
    %193 = vmatprep.mubr.bf16.mxu0 0
    %194 = vmatmul.mubr.bf16.gmra.mrb[0].mxu0 %v143
    %v195 = vpop.f32.mrb[0].mxu0
    %v196 = vadd.f32 %v61, %v195
    %v197 = vpop.f32.mrb[0].mxu0
    %v198 = vadd.f32 %v65, %v197
    %v199 = vpop.f32.mrb[0].mxu0
    %v200 = vadd.f32 %v61, %v199
    %v201 = vpop.f32.mrb[0].mxu0
    %v202 = vadd.f32 %v65, %v201
    %203 = vmatprep.mubr.bf16.mxu0 0
    %204 = vmatmul.mubr.bf16.gmra.mrb[0].mxu0 %v146
    %v205 = vpop.f32.mrb[0].mxu0
    %v206 = vadd.f32 %v61, %v205
    %v207 = vpop.f32.mrb[0].mxu0
    %v208 = vadd.f32 %v65, %v207
    %v209 = vpop.f32.mrb[0].mxu0
    %v210 = vadd.f32 %v61, %v209
    %v211 = vpop.f32.mrb[0].mxu0
    %v212 = vadd.f32 %v65, %v211
    %213 = vmatprep.mubr.bf16.mxu0 0
    %214 = vmatmul.mubr.bf16.gmra.mrb[0].mxu0 %v149
    %v215 = vpop.f32.mrb[0].mxu0
    %v216 = vadd.f32 %v61, %v215
    %v217 = vpop.f32.mrb[0].mxu0
    %v218 = vadd.f32 %v65, %v217
    %v219 = vpop.f32.mrb[0].mxu0
    %v220 = vadd.f32 %v61, %v219
    %v221 = vpop.f32.mrb[0].mxu0
    %v222 = vadd.f32 %v65, %v221
    %223 = vdwg.mxu0
    %224 = vmatprep.subr.bf16.mxu0 %v125
    %225 = vmatpush1.bf16.msra.mxu0 %v124
    %226 = vmatprep.subr.bf16.mxu0 %v129
    %227 = vmatpush1.bf16.msra.mxu0 %v128
    %228 = vmatprep.subr.bf16.mxu0 0
    %229 = vmatpush1.bf16.msra.mxu0 0
    %230 = vmatprep.subr.bf16.mxu0 0
    %231 = vmatpush1.bf16.msra.mxu0 0
    %232 = vmatprep.subr.bf16.mxu0 0
    %233 = vmatpush1.bf16.msra.mxu0 0
    %234 = vmatprep.subr.bf16.mxu0 0
    %235 = vmatpush1.bf16.msra.mxu0 0
    %236 = vmatprep.subr.bf16.mxu0 0
    %237 = vmatpush1.bf16.msra.mxu0 0
    %238 = vmatprep.subr.bf16.mxu0 0
    %239 = vmatpush1.bf16.msra.mxu0 0
    %240 = vmatprep.subr.bf16.mxu0 0
    %241 = vmatpush1.bf16.msra.mxu0 0
    %242 = vmatprep.subr.bf16.mxu0 0
    %243 = vmatpush1.bf16.msra.mxu0 0
    %244 = vmatprep.subr.bf16.mxu0 0
    %245 = vmatpush1.bf16.msra.mxu0 0
    %246 = vmatprep.subr.bf16.mxu0 0
    %247 = vmatpush1.bf16.msra.mxu0 0
    %248 = vmatprep.subr.bf16.mxu0 0
    %249 = vmatpush1.bf16.msra.mxu0 0
    %250 = vmatprep.subr.bf16.mxu0 0
    %251 = vmatpush1.bf16.msra.mxu0 0
    %252 = vmatprep.subr.bf16.mxu0 0
    %253 = vmatpush1.bf16.msra.mxu0 0
    %254 = vmatprep.subr.bf16.mxu0 0
    %255 = vmatpush1.bf16.msra.mxu0 0
    %256 = vmatprep.mubr.bf16.mxu0 0
    %257 = vmatmul.mubr.bf16.gmra.mrb[0].mxu0 %v140
    %v258 = vpop.f32.mrb[0].mxu0
    %v259 = vadd.f32 %v69, %v258
    %v260 = vpop.f32.mrb[0].mxu0
    %v261 = vadd.f32 %v73, %v260
    %v262 = vpop.f32.mrb[0].mxu0
    %v263 = vadd.f32 %v69, %v262
    %v264 = vpop.f32.mrb[0].mxu0
    %v265 = vadd.f32 %v73, %v264
    %266 = vmatprep.mubr.bf16.mxu0 0
    %267 = vmatmul.mubr.bf16.gmra.mrb[0].mxu0 %v143
    %v268 = vpop.f32.mrb[0].mxu0
    %v269 = vadd.f32 %v69, %v268
    %v270 = vpop.f32.mrb[0].mxu0
    %v271 = vadd.f32 %v73, %v270
    %v272 = vpop.f32.mrb[0].mxu0
    %v273 = vadd.f32 %v69, %v272
    %v274 = vpop.f32.mrb[0].mxu0
    %v275 = vadd.f32 %v73, %v274
    %276 = vmatprep.mubr.bf16.mxu0 0
    %277 = vmatmul.mubr.bf16.gmra.mrb[0].mxu0 %v146
    %v278 = vpop.f32.mrb[0].mxu0
    %v279 = vadd.f32 %v69, %v278
    %v280 = vpop.f32.mrb[0].mxu0
    %v281 = vadd.f32 %v73, %v280
    %v282 = vpop.f32.mrb[0].mxu0
    %v283 = vadd.f32 %v69, %v282
    %v284 = vpop.f32.mrb[0].mxu0
    %v285 = vadd.f32 %v73, %v284
    %286 = vmatprep.mubr.bf16.mxu0 0
    %287 = vmatmul.mubr.bf16.gmra.mrb[0].mxu0 %v149
    %v288 = vpop.f32.mrb[0].mxu0
    %v289 = vadd.f32 %v69, %v288
    %v290 = vpop.f32.mrb[0].mxu0
    %v291 = vadd.f32 %v73, %v290
    %v292 = vpop.f32.mrb[0].mxu0
    %v293 = vadd.f32 %v69, %v292
    %v294 = vpop.f32.mrb[0].mxu0
    %v295 = vadd.f32 %v73, %v294
    %296 = vdwg.mxu0
    %v297 = vld [vmem:[#allocation3] sm:$0xff]
    %v298 = vld [vmem:[#allocation3 + $0x8] sm:$0xff]
    %v299 = vld [vmem:[#allocation3 + $0x10] sm:$0xff]
    %v300 = vld [vmem:[#allocation3 + $0x18] sm:$0xff]
    %v301 = vld [vmem:[#allocation3 + $0x20] sm:$0xff]
    %v302 = vld [vmem:[#allocation3 + $0x28] sm:$0xff]
    %v303 = vld [vmem:[#allocation3 + $0x30] sm:$0xff]
    %v304 = vld [vmem:[#allocation3 + $0x38] sm:$0xff]
    %v305 = vld [vmem:[#allocation3 + $0x40] sm:$0xff]
    %v306 = vld [vmem:[#allocation3 + $0x48] sm:$0xff]
    %v307 = vld [vmem:[#allocation3 + $0x50] sm:$0xff]
    %v308 = vld [vmem:[#allocation3 + $0x58] sm:$0xff]
    %v309 = vld [vmem:[#allocation3 + $0x60] sm:$0xff]
    %v310 = vld [vmem:[#allocation3 + $0x68] sm:$0xff]
    %v311 = vld [vmem:[#allocation3 + $0x70] sm:$0xff]
    %v312 = vld [vmem:[#allocation3 + $0x78] sm:$0xff]
    %v313 = vld [vmem:[#allocation3 + $0x80] sm:$0xff]
    %v314 = vld [vmem:[#allocation3 + $0x88] sm:$0xff]
    %v315 = vld [vmem:[#allocation3 + $0x90] sm:$0xff]
    %v316 = vld [vmem:[#allocation3 + $0x98] sm:$0xff]
    %v317 = vld [vmem:[#allocation3 + $0xa0] sm:$0xff]
    %v318 = vld [vmem:[#allocation3 + $0xa8] sm:$0xff]
    %v319 = vld [vmem:[#allocation3 + $0xb0] sm:$0xff]
    %v320 = vld [vmem:[#allocation3 + $0xb8] sm:$0xff]
    %v321 = vld [vmem:[#allocation3 + $0xc0] sm:$0xff]
    %v322 = vld [vmem:[#allocation3 + $0xc8] sm:$0xff]
    %v323 = vld [vmem:[#allocation3 + $0xd0] sm:$0xff]
    %v324 = vld [vmem:[#allocation3 + $0xd8] sm:$0xff]
    %v325 = vld [vmem:[#allocation3 + $0xe0] sm:$0xff]
    %v326 = vld [vmem:[#allocation3 + $0xe8] sm:$0xff]
    %v327 = vld [vmem:[#allocation3 + $0xf0] sm:$0xff]
    %v328 = vld [vmem:[#allocation3 + $0xf8] sm:$0xff]
    %v329 = vlaneseq
    %v330 = vand.u32 %v329, 127
    %v331 = vadd.s32 %v330, 128
    %v332 = vadd.s32 %v330, 256
    %v333 = vadd.s32 %v330, 384
    %vm334 = vcmp.lt.s32.totalorder %v330, 0
    %v335 = vsub.s32 0, %v330
    %v336 = vsel %vm334, %v335, %v330
    %v337 = vshrl.u32 %v336, 7
    %v338 = vand.u32 %v336, 127
    %v339 = vsub.s32 0, %v338
    %v340 = vsel %vm334, %v339, %v338
    %vm341 = vcmp.lt.s32.totalorder %v331, 0
    %v342 = vsub.s32 0, %v331
    %v343 = vsel %vm341, %v342, %v331
    %v344 = vshrl.u32 %v343, 7
    %v345 = vand.u32 %v343, 127
    %v346 = vsub.s32 0, %v345
    %v347 = vsel %vm341, %v346, %v345
    %vm348 = vcmp.lt.s32.totalorder %v332, 0
    %v349 = vsub.s32 0, %v332
    %v350 = vsel %vm348, %v349, %v332
    %v351 = vshrl.u32 %v350, 7
    %v352 = vand.u32 %v350, 127
    %v353 = vsub.s32 0, %v352
    %v354 = vsel %vm348, %v353, %v352
    %vm355 = vcmp.lt.s32.totalorder %v333, 0
    %v356 = vsub.s32 0, %v333
    %v357 = vsel %vm355, %v356, %v333
    %v358 = vshrl.u32 %v357, 7
    %v359 = vand.u32 %v357, 127
    %v360 = vsub.s32 0, %v359
    %v361 = vsel %vm355, %v360, %v359
    %vm362 = vcmp.ne.s32.totalorder %v340, 0
    %vm363 = vcmp.ne.s32.totalorder %v347, 0
    %vm364 = vcmp.ne.s32.totalorder %v354, 0
    %vm365 = vcmp.ne.s32.totalorder %v361, 0
    %vm366 = vcmp.lt.s32.totalorder %v340, 0
    %vm367 = vcmp.lt.s32.totalorder %v347, 0
    %vm368 = vcmp.lt.s32.totalorder %v354, 0
    %vm369 = vcmp.lt.s32.totalorder %v361, 0
    %vm370 = vmand %vm366, %vm362
    %vm371 = vmand %vm367, %vm363
    %vm372 = vmand %vm368, %vm364
    %vm373 = vmand %vm369, %vm365
    %v374 = vadd.s32 %v340, 128
    %v375 = vadd.s32 %v347, 128
    %v376 = vadd.s32 %v354, 128
    %v377 = vadd.s32 %v361, 128
    %v378 = vsel %vm370, %v374, %v340
    %v379 = vsel %vm371, %v375, %v347
    %v380 = vsel %vm372, %v376, %v354
    %v381 = vsel %vm373, %v377, %v361
    %vm382 = vcmp.lt.s32.totalorder %v378, 32
    %vm383 = vcmp.lt.s32.totalorder %v379, 32
    %vm384 = vcmp.lt.s32.totalorder %v380, 32
    %vm385 = vcmp.lt.s32.totalorder %v381, 32
    %v386 = vsel %vm382, %v186, %v220
    %v387 = vsel %vm383, %v188, %v222
    %v388 = vsel %vm384, %v259, %v293
    %v389 = vsel %vm385, %v261, %v295
    %v422 = vunpack.c.l.b16 %v297
    %v423 = vunpack.c.h.b16 %v297
    %v424 = vunpack.c.l.b16 %v298
    %v425 = vunpack.c.h.b16 %v298
    %v426 = vunpack.c.l.b16 %v299
    %v427 = vunpack.c.h.b16 %v299
    %v428 = vunpack.c.l.b16 %v300
    %v429 = vunpack.c.h.b16 %v300
    %v430 = vunpack.c.l.b16 %v301
    %v431 = vunpack.c.h.b16 %v301
    %v432 = vunpack.c.l.b16 %v302
    %v433 = vunpack.c.h.b16 %v302
    %v434 = vunpack.c.l.b16 %v303
    %v435 = vunpack.c.h.b16 %v303
    %v436 = vunpack.c.l.b16 %v304
    %v437 = vunpack.c.h.b16 %v304
    %v438 = vunpack.c.l.b16 %v305
    %v439 = vunpack.c.h.b16 %v305
    %v440 = vunpack.c.l.b16 %v306
    %v441 = vunpack.c.h.b16 %v306
    %v442 = vunpack.c.l.b16 %v307
    %v443 = vunpack.c.h.b16 %v307
    %v444 = vunpack.c.l.b16 %v308
    %v445 = vunpack.c.h.b16 %v308
    %v446 = vunpack.c.l.b16 %v309
    %v447 = vunpack.c.h.b16 %v309
    %v448 = vunpack.c.l.b16 %v310
    %v449 = vunpack.c.h.b16 %v310
    %v450 = vunpack.c.l.b16 %v311
    %v451 = vunpack.c.h.b16 %v311
    %v452 = vunpack.c.l.b16 %v312
    %v453 = vunpack.c.h.b16 %v312
    %v454 = vunpack.c.l.b16 %v313
    %v455 = vunpack.c.h.b16 %v313
    %v456 = vunpack.c.l.b16 %v314
    %v457 = vunpack.c.h.b16 %v314
    %v458 = vunpack.c.l.b16 %v315
    %v459 = vunpack.c.h.b16 %v315
    %v460 = vunpack.c.l.b16 %v316
    %v461 = vunpack.c.h.b16 %v316
    %v462 = vunpack.c.l.b16 %v317
    %v463 = vunpack.c.h.b16 %v317
    %v464 = vunpack.c.l.b16 %v318
    %v465 = vunpack.c.h.b16 %v318
    %v466 = vunpack.c.l.b16 %v319
    %v467 = vunpack.c.h.b16 %v319
    %v468 = vunpack.c.l.b16 %v320
    %v469 = vunpack.c.h.b16 %v320
    %v470 = vunpack.c.l.b16 %v321
    %v471 = vunpack.c.h.b16 %v321
    %v472 = vunpack.c.l.b16 %v322
    %v473 = vunpack.c.h.b16 %v322
    %v474 = vunpack.c.l.b16 %v323
    %v475 = vunpack.c.h.b16 %v323
    %v476 = vunpack.c.l.b16 %v324
    %v477 = vunpack.c.h.b16 %v324
    %v478 = vunpack.c.l.b16 %v325
    %v479 = vunpack.c.h.b16 %v325
    %v480 = vunpack.c.l.b16 %v326
    %v481 = vunpack.c.h.b16 %v326
    %v482 = vunpack.c.l.b16 %v327
    %v483 = vunpack.c.h.b16 %v327
    %v484 = vunpack.c.l.b16 %v328
    %v485 = vunpack.c.h.b16 %v328
    %v486 = vpack.c.b16 %v426, %v422
    %v487 = vpack.c.b16 %v427, %v423
    %v488 = vpack.c.b16 %v428, %v424
    %v489 = vpack.c.b16 %v429, %v425
    %v490 = vpack.c.b16 %v434, %v430
    %v491 = vpack.c.b16 %v435, %v431
    %v492 = vpack.c.b16 %v436, %v432
    %v493 = vpack.c.b16 %v437, %v433
    %v494 = vpack.c.b16 %v442, %v438
    %v495 = vpack.c.b16 %v443, %v439
    %v496 = vpack.c.b16 %v444, %v440
    %v497 = vpack.c.b16 %v445, %v441
    %v498 = vpack.c.b16 %v450, %v446
    %v499 = vpack.c.b16 %v451, %v447
    %v500 = vpack.c.b16 %v452, %v448
    %v501 = vpack.c.b16 %v453, %v449
    %v502 = vpack.c.b16 %v458, %v454
    %v503 = vpack.c.b16 %v459, %v455
    %v504 = vpack.c.b16 %v460, %v456
    %v505 = vpack.c.b16 %v461, %v457
    %v506 = vpack.c.b16 %v466, %v462
    %v507 = vpack.c.b16 %v467, %v463
    %v508 = vpack.c.b16 %v468, %v464
    %v509 = vpack.c.b16 %v469, %v465
    %v510 = vpack.c.b16 %v474, %v470
    %v511 = vpack.c.b16 %v475, %v471
    %v512 = vpack.c.b16 %v476, %v472
    %v513 = vpack.c.b16 %v477, %v473
    %v514 = vpack.c.b16 %v482, %v478
    %v515 = vpack.c.b16 %v483, %v479
    %v516 = vpack.c.b16 %v484, %v480
    %v517 = vpack.c.b16 %v485, %v481
    %550 = vmatprep.subr.bf16.mxu0 %v487
    %551 = vmatpush1.bf16.msra.mxu0 %v486
    %552 = vmatprep.subr.bf16.mxu0 %v491
    %553 = vmatpush1.bf16.msra.mxu0 %v490
    %554 = vmatprep.subr.bf16.mxu0 %v495
    %555 = vmatpush1.bf16.msra.mxu0 %v494
    %556 = vmatprep.subr.bf16.mxu0 %v499
    %557 = vmatpush1.bf16.msra.mxu0 %v498
    %558 = vmatprep.subr.bf16.mxu0 %v503
    %559 = vmatpush1.bf16.msra.mxu0 %v502
    %560 = vmatprep.subr.bf16.mxu0 %v507
    %561 = vmatpush1.bf16.msra.mxu0 %v506
    %562 = vmatprep.subr.bf16.mxu0 %v511
    %563 = vmatpush1.bf16.msra.mxu0 %v510
    %564 = vmatprep.subr.bf16.mxu0 %v515
    %565 = vmatpush1.bf16.msra.mxu0 %v514
    %566 = vmatprep.subr.bf16.mxu0 0
    %567 = vmatpush1.bf16.msra.mxu0 0
    %568 = vmatprep.subr.bf16.mxu0 0
    %569 = vmatpush1.bf16.msra.mxu0 0
    %570 = vmatprep.subr.bf16.mxu0 0
    %571 = vmatpush1.bf16.msra.mxu0 0
    %572 = vmatprep.subr.bf16.mxu0 0
    %573 = vmatpush1.bf16.msra.mxu0 0
    %574 = vmatprep.subr.bf16.mxu0 0
    %575 = vmatpush1.bf16.msra.mxu0 0
    %576 = vmatprep.subr.bf16.mxu0 0
    %577 = vmatpush1.bf16.msra.mxu0 0
    %578 = vmatprep.subr.bf16.mxu0 0
    %579 = vmatpush1.bf16.msra.mxu0 0
    %580 = vmatprep.subr.bf16.mxu0 0
    %581 = vmatpush1.bf16.msra.mxu0 0
    %582 = vmatprep.mubr.bf16.mxu0 0
    %583 = vmatmul.mubr.bf16.gmra.mrb[0].mxu0 0
    %v584 = vpop.f32.mrb[0].mxu0
    %v585 = vadd.f32 0.0, %v584
    %v586 = vpop.f32.mrb[0].mxu0
    %v587 = vadd.f32 0.0, %v586
    %v588 = vpop.f32.mrb[0].mxu0
    %v589 = vpop.f32.mrb[0].mxu0
    %590 = vdwg.mxu0
    %591 = vmatprep.subr.bf16.mxu0 %v489
    %592 = vmatpush1.bf16.msra.mxu0 %v488
    %593 = vmatprep.subr.bf16.mxu0 %v493
    %594 = vmatpush1.bf16.msra.mxu0 %v492
    %595 = vmatprep.subr.bf16.mxu0 %v497
    %596 = vmatpush1.bf16.msra.mxu0 %v496
    %597 = vmatprep.subr.bf16.mxu0 %v501
    %598 = vmatpush1.bf16.msra.mxu0 %v500
    %599 = vmatprep.subr.bf16.mxu0 %v505
    %600 = vmatpush1.bf16.msra.mxu0 %v504
    %601 = vmatprep.subr.bf16.mxu0 %v509
    %602 = vmatpush1.bf16.msra.mxu0 %v508
    %603 = vmatprep.subr.bf16.mxu0 %v513
    %604 = vmatpush1.bf16.msra.mxu0 %v512
    %605 = vmatprep.subr.bf16.mxu0 %v517
    %606 = vmatpush1.bf16.msra.mxu0 %v516
    %607 = vmatprep.subr.bf16.mxu0 0
    %608 = vmatpush1.bf16.msra.mxu0 0
    %609 = vmatprep.subr.bf16.mxu0 0
    %610 = vmatpush1.bf16.msra.mxu0 0
    %611 = vmatprep.subr.bf16.mxu0 0
    %612 = vmatpush1.bf16.msra.mxu0 0
    %613 = vmatprep.subr.bf16.mxu0 0
    %614 = vmatpush1.bf16.msra.mxu0 0
    %615 = vmatprep.subr.bf16.mxu0 0
    %616 = vmatpush1.bf16.msra.mxu0 0
    %617 = vmatprep.subr.bf16.mxu0 0
    %618 = vmatpush1.bf16.msra.mxu0 0
    %619 = vmatprep.subr.bf16.mxu0 0
    %620 = vmatpush1.bf16.msra.mxu0 0
    %621 = vmatprep.subr.bf16.mxu0 0
    %622 = vmatpush1.bf16.msra.mxu0 0
    %623 = vmatprep.mubr.bf16.mxu0 0
    %624 = vmatmul.mubr.bf16.gmra.mrb[0].mxu0 0
    %v625 = vpop.f32.mrb[0].mxu0
    %v626 = vadd.f32 0.0, %v625
    %v627 = vpop.f32.mrb[0].mxu0
    %v628 = vadd.f32 0.0, %v627
    %v629 = vpop.f32.mrb[0].mxu0
    %v630 = vpop.f32.mrb[0].mxu0
    %631 = vdwg.mxu0
    %v632 = vadd.f32 %v386, %v585
    %v633 = vadd.f32 %v387, %v587
    %v634 = vadd.f32 %v388, %v626
    %v635 = vadd.f32 %v389, %v628
    %v636 = vxor.u32 %v632, 2147483648
    %v637 = vxor.u32 %v633, 2147483648
    %v638 = vxor.u32 %v634, 2147483648
    %v639 = vmul.f32 %v636, 1.442695
    %v640 = vpow.pop %v639
    %v641 = vmul.f32 %v637, 1.442695
    %v642 = vpow.pop %v641
    %v643 = vmul.f32 %v638, 1.442695
    %v644 = vpow.pop %v643
    %v645 = vadd.f32 %v640, 1.0
    %v646 = vadd.f32 %v642, 1.0
    %v647 = vadd.f32 %v644, 1.0
    %v648 = vrcp.pop %v645
    %v649 = vmul.f32 1.0, %v648
    %v650 = vrcp.pop %v646
    %v651 = vmul.f32 1.0, %v650
    %v652 = vrcp.pop %v647
    %v653 = vmul.f32 1.0, %v652
    %v654 = vtanh.pop %v635
    %v655 = vmul.f32 %v651, 0.0
    %v656 = vmul.f32 %v649, %v654
    %v657 = vadd.f32 %v655, %v656
    %v658 = vtanh.pop %v657
    %v659 = vmul.f32 %v653, %v658
    %v660 = vsel %vm382, %v190, %v216
    %v661 = vsel %vm383, %v192, %v218
    %v662 = vsel %vm384, %v263, %v289
    %v663 = vsel %vm385, %v265, %v291
    %v664 = vpack.c.bf16 %v659, %v659
    %665 = vmatprep.subr.bf16.mxu0 %v487
    %666 = vmatpush1.bf16.msra.mxu0 %v486
    %667 = vmatprep.subr.bf16.mxu0 %v491
    %668 = vmatpush1.bf16.msra.mxu0 %v490
    %669 = vmatprep.subr.bf16.mxu0 %v495
    %670 = vmatpush1.bf16.msra.mxu0 %v494
    %671 = vmatprep.subr.bf16.mxu0 %v499
    %672 = vmatpush1.bf16.msra.mxu0 %v498
    %673 = vmatprep.subr.bf16.mxu0 %v503
    %674 = vmatpush1.bf16.msra.mxu0 %v502
    %675 = vmatprep.subr.bf16.mxu0 %v507
    %676 = vmatpush1.bf16.msra.mxu0 %v506
    %677 = vmatprep.subr.bf16.mxu0 %v511
    %678 = vmatpush1.bf16.msra.mxu0 %v510
    %679 = vmatprep.subr.bf16.mxu0 %v515
    %680 = vmatpush1.bf16.msra.mxu0 %v514
    %681 = vmatprep.subr.bf16.mxu0 0
    %682 = vmatpush1.bf16.msra.mxu0 0
    %683 = vmatprep.subr.bf16.mxu0 0
    %684 = vmatpush1.bf16.msra.mxu0 0
    %685 = vmatprep.subr.bf16.mxu0 0
    %686 = vmatpush1.bf16.msra.mxu0 0
    %687 = vmatprep.subr.bf16.mxu0 0
    %688 = vmatpush1.bf16.msra.mxu0 0
    %689 = vmatprep.subr.bf16.mxu0 0
    %690 = vmatpush1.bf16.msra.mxu0 0
    %691 = vmatprep.subr.bf16.mxu0 0
    %692 = vmatpush1.bf16.msra.mxu0 0
    %693 = vmatprep.subr.bf16.mxu0 0
    %694 = vmatpush1.bf16.msra.mxu0 0
    %695 = vmatprep.subr.bf16.mxu0 0
    %696 = vmatpush1.bf16.msra.mxu0 0
    %697 = vmatprep.mubr.bf16.mxu0 0
    %698 = vmatmul.mubr.bf16.gmra.mrb[0].mxu0 %v664
    %v699 = vpop.f32.mrb[0].mxu0
    %v700 = vadd.f32 0.0, %v699
    %v701 = vpop.f32.mrb[0].mxu0
    %v702 = vadd.f32 0.0, %v701
    %v703 = vpop.f32.mrb[0].mxu0
    %v704 = vpop.f32.mrb[0].mxu0
    %705 = vdwg.mxu0
    %706 = vmatprep.subr.bf16.mxu0 %v489
    %707 = vmatpush1.bf16.msra.mxu0 %v488
    %708 = vmatprep.subr.bf16.mxu0 %v493
    %709 = vmatpush1.bf16.msra.mxu0 %v492
    %710 = vmatprep.subr.bf16.mxu0 %v497
    %711 = vmatpush1.bf16.msra.mxu0 %v496
    %712 = vmatprep.subr.bf16.mxu0 %v501
    %713 = vmatpush1.bf16.msra.mxu0 %v500
    %714 = vmatprep.subr.bf16.mxu0 %v505
    %715 = vmatpush1.bf16.msra.mxu0 %v504
    %716 = vmatprep.subr.bf16.mxu0 %v509
    %717 = vmatpush1.bf16.msra.mxu0 %v508
    %718 = vmatprep.subr.bf16.mxu0 %v513
    %719 = vmatpush1.bf16.msra.mxu0 %v512
    %720 = vmatprep.subr.bf16.mxu0 %v517
    %721 = vmatpush1.bf16.msra.mxu0 %v516
    %722 = vmatprep.subr.bf16.mxu0 0
    %723 = vmatpush1.bf16.msra.mxu0 0
    %724 = vmatprep.subr.bf16.mxu0 0
    %725 = vmatpush1.bf16.msra.mxu0 0
    %726 = vmatprep.subr.bf16.mxu0 0
    %727 = vmatpush1.bf16.msra.mxu0 0
    %728 = vmatprep.subr.bf16.mxu0 0
    %729 = vmatpush1.bf16.msra.mxu0 0
    %730 = vmatprep.subr.bf16.mxu0 0
    %731 = vmatpush1.bf16.msra.mxu0 0
    %732 = vmatprep.subr.bf16.mxu0 0
    %733 = vmatpush1.bf16.msra.mxu0 0
    %734 = vmatprep.subr.bf16.mxu0 0
    %735 = vmatpush1.bf16.msra.mxu0 0
    %736 = vmatprep.subr.bf16.mxu0 0
    %737 = vmatpush1.bf16.msra.mxu0 0
    %738 = vmatprep.mubr.bf16.mxu0 0
    %739 = vmatmul.mubr.bf16.gmra.mrb[0].mxu0 %v664
    %v740 = vpop.f32.mrb[0].mxu0
    %v741 = vadd.f32 0.0, %v740
    %v742 = vpop.f32.mrb[0].mxu0
    %v743 = vadd.f32 0.0, %v742
    %v744 = vpop.f32.mrb[0].mxu0
    %v745 = vpop.f32.mrb[0].mxu0
    %746 = vdwg.mxu0
    %v747 = vadd.f32 %v660, %v700
    %v748 = vadd.f32 %v661, %v702
    %v749 = vadd.f32 %v662, %v741
    %v750 = vadd.f32 %v663, %v743
    %v751 = vxor.u32 %v747, 2147483648
    %v752 = vxor.u32 %v748, 2147483648
    %v753 = vxor.u32 %v749, 2147483648
    %v754 = vmul.f32 %v751, 1.442695
    %v755 = vpow.pop %v754
    %v756 = vmul.f32 %v752, 1.442695
    %v757 = vpow.pop %v756
    %v758 = vmul.f32 %v753, 1.442695
    %v759 = vpow.pop %v758
    %v760 = vadd.f32 %v755, 1.0
    %v761 = vadd.f32 %v757, 1.0
    %v762 = vadd.f32 %v759, 1.0
    %v763 = vrcp.pop %v760
    %v764 = vmul.f32 1.0, %v763
    %v765 = vrcp.pop %v761
    %v766 = vmul.f32 1.0, %v765
    %v767 = vrcp.pop %v762
    %v768 = vmul.f32 1.0, %v767
    %v769 = vtanh.pop %v750
    %v770 = vmul.f32 %v766, %v657
    %v771 = vmul.f32 %v764, %v769
    %v772 = vadd.f32 %v770, %v771
    %v773 = vtanh.pop %v772
    %v774 = vmul.f32 %v768, %v773
    %v775 = vsel %vm382, %v196, %v210
    %v776 = vsel %vm383, %v198, %v212
    %v777 = vsel %vm384, %v269, %v283
    %v778 = vsel %vm385, %v271, %v285
    %v779 = vpack.c.bf16 %v774, %v774
    %780 = vmatprep.subr.bf16.mxu0 %v487
    %781 = vmatpush1.bf16.msra.mxu0 %v486
    %782 = vmatprep.subr.bf16.mxu0 %v491
    %783 = vmatpush1.bf16.msra.mxu0 %v490
    %784 = vmatprep.subr.bf16.mxu0 %v495
    %785 = vmatpush1.bf16.msra.mxu0 %v494
    %786 = vmatprep.subr.bf16.mxu0 %v499
    %787 = vmatpush1.bf16.msra.mxu0 %v498
    %788 = vmatprep.subr.bf16.mxu0 %v503
    %789 = vmatpush1.bf16.msra.mxu0 %v502
    %790 = vmatprep.subr.bf16.mxu0 %v507
    %791 = vmatpush1.bf16.msra.mxu0 %v506
    %792 = vmatprep.subr.bf16.mxu0 %v511
    %793 = vmatpush1.bf16.msra.mxu0 %v510
    %794 = vmatprep.subr.bf16.mxu0 %v515
    %795 = vmatpush1.bf16.msra.mxu0 %v514
    %796 = vmatprep.subr.bf16.mxu0 0
    %797 = vmatpush1.bf16.msra.mxu0 0
    %798 = vmatprep.subr.bf16.mxu0 0
    %799 = vmatpush1.bf16.msra.mxu0 0
    %800 = vmatprep.subr.bf16.mxu0 0
    %801 = vmatpush1.bf16.msra.mxu0 0
    %802 = vmatprep.subr.bf16.mxu0 0
    %803 = vmatpush1.bf16.msra.mxu0 0
    %804 = vmatprep.subr.bf16.mxu0 0
    %805 = vmatpush1.bf16.msra.mxu0 0
    %806 = vmatprep.subr.bf16.mxu0 0
    %807 = vmatpush1.bf16.msra.mxu0 0
    %808 = vmatprep.subr.bf16.mxu0 0
    %809 = vmatpush1.bf16.msra.mxu0 0
    %810 = vmatprep.subr.bf16.mxu0 0
    %811 = vmatpush1.bf16.msra.mxu0 0
    %812 = vmatprep.mubr.bf16.mxu0 0
    %813 = vmatmul.mubr.bf16.gmra.mrb[0].mxu0 %v779
    %v814 = vpop.f32.mrb[0].mxu0
    %v815 = vadd.f32 0.0, %v814
    %v816 = vpop.f32.mrb[0].mxu0
    %v817 = vadd.f32 0.0, %v816
    %v818 = vpop.f32.mrb[0].mxu0
    %v819 = vpop.f32.mrb[0].mxu0
    %820 = vdwg.mxu0
    %821 = vmatprep.subr.bf16.mxu0 %v489
    %822 = vmatpush1.bf16.msra.mxu0 %v488
    %823 = vmatprep.subr.bf16.mxu0 %v493
    %824 = vmatpush1.bf16.msra.mxu0 %v492
    %825 = vmatprep.subr.bf16.mxu0 %v497
    %826 = vmatpush1.bf16.msra.mxu0 %v496
    %827 = vmatprep.subr.bf16.mxu0 %v501
    %828 = vmatpush1.bf16.msra.mxu0 %v500
    %829 = vmatprep.subr.bf16.mxu0 %v505
    %830 = vmatpush1.bf16.msra.mxu0 %v504
    %831 = vmatprep.subr.bf16.mxu0 %v509
    %832 = vmatpush1.bf16.msra.mxu0 %v508
    %833 = vmatprep.subr.bf16.mxu0 %v513
    %834 = vmatpush1.bf16.msra.mxu0 %v512
    %835 = vmatprep.subr.bf16.mxu0 %v517
    %836 = vmatpush1.bf16.msra.mxu0 %v516
    %837 = vmatprep.subr.bf16.mxu0 0
    %838 = vmatpush1.bf16.msra.mxu0 0
    %839 = vmatprep.subr.bf16.mxu0 0
    %840 = vmatpush1.bf16.msra.mxu0 0
    %841 = vmatprep.subr.bf16.mxu0 0
    %842 = vmatpush1.bf16.msra.mxu0 0
    %843 = vmatprep.subr.bf16.mxu0 0
    %844 = vmatpush1.bf16.msra.mxu0 0
    %845 = vmatprep.subr.bf16.mxu0 0
    %846 = vmatpush1.bf16.msra.mxu0 0
    %847 = vmatprep.subr.bf16.mxu0 0
    %848 = vmatpush1.bf16.msra.mxu0 0
    %849 = vmatprep.subr.bf16.mxu0 0
    %850 = vmatpush1.bf16.msra.mxu0 0
    %851 = vmatprep.subr.bf16.mxu0 0
    %852 = vmatpush1.bf16.msra.mxu0 0
    %853 = vmatprep.mubr.bf16.mxu0 0
    %854 = vmatmul.mubr.bf16.gmra.mrb[0].mxu0 %v779
    %v855 = vpop.f32.mrb[0].mxu0
    %v856 = vadd.f32 0.0, %v855
    %v857 = vpop.f32.mrb[0].mxu0
    %v858 = vadd.f32 0.0, %v857
    %v859 = vpop.f32.mrb[0].mxu0
    %v860 = vpop.f32.mrb[0].mxu0
    %861 = vdwg.mxu0
    %v862 = vadd.f32 %v775, %v815
    %v863 = vadd.f32 %v776, %v817
    %v864 = vadd.f32 %v777, %v856
    %v865 = vadd.f32 %v778, %v858
    %v866 = vxor.u32 %v862, 2147483648
    %v867 = vxor.u32 %v863, 2147483648
    %v868 = vxor.u32 %v864, 2147483648
    %v869 = vmul.f32 %v866, 1.442695
    %v870 = vpow.pop %v869
    %v871 = vmul.f32 %v867, 1.442695
    %v872 = vpow.pop %v871
    %v873 = vmul.f32 %v868, 1.442695
    %v874 = vpow.pop %v873
    %v875 = vadd.f32 %v870, 1.0
    %v876 = vadd.f32 %v872, 1.0
    %v877 = vadd.f32 %v874, 1.0
    %v878 = vrcp.pop %v875
    %v879 = vmul.f32 1.0, %v878
    %v880 = vrcp.pop %v876
    %v881 = vmul.f32 1.0, %v880
    %v882 = vrcp.pop %v877
    %v883 = vmul.f32 1.0, %v882
    %v884 = vtanh.pop %v865
    %v885 = vmul.f32 %v881, %v772
    %v886 = vmul.f32 %v879, %v884
    %v887 = vadd.f32 %v885, %v886
    %v888 = vtanh.pop %v887
    %v889 = vmul.f32 %v883, %v888
    %v890 = vsel %vm382, %v200, %v206
    %v891 = vsel %vm383, %v202, %v208
    %v892 = vsel %vm384, %v273, %v279
    %v893 = vsel %vm385, %v275, %v281
    %v894 = vpack.c.bf16 %v889, %v889
    %895 = vmatprep.subr.bf16.mxu0 %v487
    %896 = vmatpush1.bf16.msra.mxu0 %v486
    %897 = vmatprep.subr.bf16.mxu0 %v491
    %898 = vmatpush1.bf16.msra.mxu0 %v490
    %899 = vmatprep.subr.bf16.mxu0 %v495
    %900 = vmatpush1.bf16.msra.mxu0 %v494
    %901 = vmatprep.subr.bf16.mxu0 %v499
    %902 = vmatpush1.bf16.msra.mxu0 %v498
    %903 = vmatprep.subr.bf16.mxu0 %v503
    %904 = vmatpush1.bf16.msra.mxu0 %v502
    %905 = vmatprep.subr.bf16.mxu0 %v507
    %906 = vmatpush1.bf16.msra.mxu0 %v506
    %907 = vmatprep.subr.bf16.mxu0 %v511
    %908 = vmatpush1.bf16.msra.mxu0 %v510
    %909 = vmatprep.subr.bf16.mxu0 %v515
    %910 = vmatpush1.bf16.msra.mxu0 %v514
    %911 = vmatprep.subr.bf16.mxu0 0
    %912 = vmatpush1.bf16.msra.mxu0 0
    %913 = vmatprep.subr.bf16.mxu0 0
    %914 = vmatpush1.bf16.msra.mxu0 0
    %915 = vmatprep.subr.bf16.mxu0 0
    %916 = vmatpush1.bf16.msra.mxu0 0
    %917 = vmatprep.subr.bf16.mxu0 0
    %918 = vmatpush1.bf16.msra.mxu0 0
    %919 = vmatprep.subr.bf16.mxu0 0
    %920 = vmatpush1.bf16.msra.mxu0 0
    %921 = vmatprep.subr.bf16.mxu0 0
    %922 = vmatpush1.bf16.msra.mxu0 0
    %923 = vmatprep.subr.bf16.mxu0 0
    %924 = vmatpush1.bf16.msra.mxu0 0
    %925 = vmatprep.subr.bf16.mxu0 0
    %926 = vmatpush1.bf16.msra.mxu0 0
    %927 = vmatprep.mubr.bf16.mxu0 0
    %928 = vmatmul.mubr.bf16.gmra.mrb[0].mxu0 %v894
    %v929 = vpop.f32.mrb[0].mxu0
    %v930 = vadd.f32 0.0, %v929
    %v931 = vpop.f32.mrb[0].mxu0
    %v932 = vadd.f32 0.0, %v931
    %v933 = vpop.f32.mrb[0].mxu0
    %v934 = vpop.f32.mrb[0].mxu0
    %935 = vdwg.mxu0
    %936 = vmatprep.subr.bf16.mxu0 %v489
    %937 = vmatpush1.bf16.msra.mxu0 %v488
    %938 = vmatprep.subr.bf16.mxu0 %v493
    %939 = vmatpush1.bf16.msra.mxu0 %v492
    %940 = vmatprep.subr.bf16.mxu0 %v497
    %941 = vmatpush1.bf16.msra.mxu0 %v496
    %942 = vmatprep.subr.bf16.mxu0 %v501
    %943 = vmatpush1.bf16.msra.mxu0 %v500
    %944 = vmatprep.subr.bf16.mxu0 %v505
    %945 = vmatpush1.bf16.msra.mxu0 %v504
    %946 = vmatprep.subr.bf16.mxu0 %v509
    %947 = vmatpush1.bf16.msra.mxu0 %v508
    %948 = vmatprep.subr.bf16.mxu0 %v513
    %949 = vmatpush1.bf16.msra.mxu0 %v512
    %950 = vmatprep.subr.bf16.mxu0 %v517
    %951 = vmatpush1.bf16.msra.mxu0 %v516
    %952 = vmatprep.subr.bf16.mxu0 0
    %953 = vmatpush1.bf16.msra.mxu0 0
    %954 = vmatprep.subr.bf16.mxu0 0
    %955 = vmatpush1.bf16.msra.mxu0 0
    %956 = vmatprep.subr.bf16.mxu0 0
    %957 = vmatpush1.bf16.msra.mxu0 0
    %958 = vmatprep.subr.bf16.mxu0 0
    %959 = vmatpush1.bf16.msra.mxu0 0
    %960 = vmatprep.subr.bf16.mxu0 0
    %961 = vmatpush1.bf16.msra.mxu0 0
    %962 = vmatprep.subr.bf16.mxu0 0
    %963 = vmatpush1.bf16.msra.mxu0 0
    %964 = vmatprep.subr.bf16.mxu0 0
    %965 = vmatpush1.bf16.msra.mxu0 0
    %966 = vmatprep.subr.bf16.mxu0 0
    %967 = vmatpush1.bf16.msra.mxu0 0
    %968 = vmatprep.mubr.bf16.mxu0 0
    %969 = vmatmul.mubr.bf16.gmra.mrb[0].mxu0 %v894
    %v970 = vpop.f32.mrb[0].mxu0
    %v971 = vadd.f32 0.0, %v970
    %v972 = vpop.f32.mrb[0].mxu0
    %v973 = vadd.f32 0.0, %v972
    %v974 = vpop.f32.mrb[0].mxu0
    %v975 = vpop.f32.mrb[0].mxu0
    %976 = vdwg.mxu0
    %v977 = vadd.f32 %v890, %v930
    %v978 = vadd.f32 %v891, %v932
    %v979 = vadd.f32 %v892, %v971
    %v980 = vadd.f32 %v893, %v973
    %v981 = vxor.u32 %v977, 2147483648
    %v982 = vxor.u32 %v978, 2147483648
    %v983 = vxor.u32 %v979, 2147483648
    %v984 = vmul.f32 %v981, 1.442695
    %v985 = vpow.pop %v984
    %v986 = vmul.f32 %v982, 1.442695
    %v987 = vpow.pop %v986
    %v988 = vmul.f32 %v983, 1.442695
    %v989 = vpow.pop %v988
    %v990 = vadd.f32 %v985, 1.0
    %v991 = vadd.f32 %v987, 1.0
    %v992 = vadd.f32 %v989, 1.0
    %v993 = vrcp.pop %v990
    %v994 = vmul.f32 1.0, %v993
    %v995 = vrcp.pop %v991
    %v996 = vmul.f32 1.0, %v995
    %v997 = vrcp.pop %v992
    %v998 = vmul.f32 1.0, %v997
    %v999 = vtanh.pop %v980
    %v1000 = vmul.f32 %v996, %v887
    %v1001 = vmul.f32 %v994, %v999
    %v1002 = vadd.f32 %v1000, %v1001
    %v1003 = vtanh.pop %v1002
    %v1004 = vmul.f32 %v998, %v1003
    %v1005 = vsel %vm382, %v206, %v200
    %v1006 = vsel %vm383, %v208, %v202
    %v1007 = vsel %vm384, %v279, %v273
    %v1008 = vsel %vm385, %v281, %v275
    %v1009 = vpack.c.bf16 %v1004, %v1004
    %1010 = vmatprep.subr.bf16.mxu0 %v487
    %1011 = vmatpush1.bf16.msra.mxu0 %v486
    %1012 = vmatprep.subr.bf16.mxu0 %v491
    %1013 = vmatpush1.bf16.msra.mxu0 %v490
    %1014 = vmatprep.subr.bf16.mxu0 %v495
    %1015 = vmatpush1.bf16.msra.mxu0 %v494
    %1016 = vmatprep.subr.bf16.mxu0 %v499
    %1017 = vmatpush1.bf16.msra.mxu0 %v498
    %1018 = vmatprep.subr.bf16.mxu0 %v503
    %1019 = vmatpush1.bf16.msra.mxu0 %v502
    %1020 = vmatprep.subr.bf16.mxu0 %v507
    %1021 = vmatpush1.bf16.msra.mxu0 %v506
    %1022 = vmatprep.subr.bf16.mxu0 %v511
    %1023 = vmatpush1.bf16.msra.mxu0 %v510
    %1024 = vmatprep.subr.bf16.mxu0 %v515
    %1025 = vmatpush1.bf16.msra.mxu0 %v514
    %1026 = vmatprep.subr.bf16.mxu0 0
    %1027 = vmatpush1.bf16.msra.mxu0 0
    %1028 = vmatprep.subr.bf16.mxu0 0
    %1029 = vmatpush1.bf16.msra.mxu0 0
    %1030 = vmatprep.subr.bf16.mxu0 0
    %1031 = vmatpush1.bf16.msra.mxu0 0
    %1032 = vmatprep.subr.bf16.mxu0 0
    %1033 = vmatpush1.bf16.msra.mxu0 0
    %1034 = vmatprep.subr.bf16.mxu0 0
    %1035 = vmatpush1.bf16.msra.mxu0 0
    %1036 = vmatprep.subr.bf16.mxu0 0
    %1037 = vmatpush1.bf16.msra.mxu0 0
    %1038 = vmatprep.subr.bf16.mxu0 0
    %1039 = vmatpush1.bf16.msra.mxu0 0
    %1040 = vmatprep.subr.bf16.mxu0 0
    %1041 = vmatpush1.bf16.msra.mxu0 0
    %1042 = vmatprep.mubr.bf16.mxu0 0
    %1043 = vmatmul.mubr.bf16.gmra.mrb[0].mxu0 %v1009
    %v1044 = vpop.f32.mrb[0].mxu0
    %v1045 = vadd.f32 0.0, %v1044
    %v1046 = vpop.f32.mrb[0].mxu0
    %v1047 = vadd.f32 0.0, %v1046
    %v1048 = vpop.f32.mrb[0].mxu0
    %v1049 = vpop.f32.mrb[0].mxu0
    %1050 = vdwg.mxu0
    %1051 = vmatprep.subr.bf16.mxu0 %v489
    %1052 = vmatpush1.bf16.msra.mxu0 %v488
    %1053 = vmatprep.subr.bf16.mxu0 %v493
    %1054 = vmatpush1.bf16.msra.mxu0 %v492
    %1055 = vmatprep.subr.bf16.mxu0 %v497
    %1056 = vmatpush1.bf16.msra.mxu0 %v496
    %1057 = vmatprep.subr.bf16.mxu0 %v501
    %1058 = vmatpush1.bf16.msra.mxu0 %v500
    %1059 = vmatprep.subr.bf16.mxu0 %v505
    %1060 = vmatpush1.bf16.msra.mxu0 %v504
    %1061 = vmatprep.subr.bf16.mxu0 %v509
    %1062 = vmatpush1.bf16.msra.mxu0 %v508
    %1063 = vmatprep.subr.bf16.mxu0 %v513
    %1064 = vmatpush1.bf16.msra.mxu0 %v512
    %1065 = vmatprep.subr.bf16.mxu0 %v517
    %1066 = vmatpush1.bf16.msra.mxu0 %v516
    %1067 = vmatprep.subr.bf16.mxu0 0
    %1068 = vmatpush1.bf16.msra.mxu0 0
    %1069 = vmatprep.subr.bf16.mxu0 0
    %1070 = vmatpush1.bf16.msra.mxu0 0
    %1071 = vmatprep.subr.bf16.mxu0 0
    %1072 = vmatpush1.bf16.msra.mxu0 0
    %1073 = vmatprep.subr.bf16.mxu0 0
    %1074 = vmatpush1.bf16.msra.mxu0 0
    %1075 = vmatprep.subr.bf16.mxu0 0
    %1076 = vmatpush1.bf16.msra.mxu0 0
    %1077 = vmatprep.subr.bf16.mxu0 0
    %1078 = vmatpush1.bf16.msra.mxu0 0
    %1079 = vmatprep.subr.bf16.mxu0 0
    %1080 = vmatpush1.bf16.msra.mxu0 0
    %1081 = vmatprep.subr.bf16.mxu0 0
    %1082 = vmatpush1.bf16.msra.mxu0 0
    %1083 = vmatprep.mubr.bf16.mxu0 0
    %1084 = vmatmul.mubr.bf16.gmra.mrb[0].mxu0 %v1009
    %v1085 = vpop.f32.mrb[0].mxu0
    %v1086 = vadd.f32 0.0, %v1085
    %v1087 = vpop.f32.mrb[0].mxu0
    %v1088 = vadd.f32 0.0, %v1087
    %v1089 = vpop.f32.mrb[0].mxu0
    %v1090 = vpop.f32.mrb[0].mxu0
    %1091 = vdwg.mxu0
    %v1092 = vadd.f32 %v1005, %v1045
    %v1093 = vadd.f32 %v1006, %v1047
    %v1094 = vadd.f32 %v1007, %v1086
    %v1095 = vadd.f32 %v1008, %v1088
    %v1096 = vxor.u32 %v1092, 2147483648
    %v1097 = vxor.u32 %v1093, 2147483648
    %v1098 = vxor.u32 %v1094, 2147483648
    %v1099 = vmul.f32 %v1096, 1.442695
    %v1100 = vpow.pop %v1099
    %v1101 = vmul.f32 %v1097, 1.442695
    %v1102 = vpow.pop %v1101
    %v1103 = vmul.f32 %v1098, 1.442695
    %v1104 = vpow.pop %v1103
    %v1105 = vadd.f32 %v1100, 1.0
    %v1106 = vadd.f32 %v1102, 1.0
    %v1107 = vadd.f32 %v1104, 1.0
    %v1108 = vrcp.pop %v1105
    %v1109 = vmul.f32 1.0, %v1108
    %v1110 = vrcp.pop %v1106
    %v1111 = vmul.f32 1.0, %v1110
    %v1112 = vrcp.pop %v1107
    %v1113 = vmul.f32 1.0, %v1112
    %v1114 = vtanh.pop %v1095
    %v1115 = vmul.f32 %v1111, %v1002
    %v1116 = vmul.f32 %v1109, %v1114
    %v1117 = vadd.f32 %v1115, %v1116
    %v1118 = vtanh.pop %v1117
    %v1119 = vmul.f32 %v1113, %v1118
    %v1120 = vsel %vm382, %v210, %v196
    %v1121 = vsel %vm383, %v212, %v198
    %v1122 = vsel %vm384, %v283, %v269
    %v1123 = vsel %vm385, %v285, %v271
    %v1124 = vpack.c.bf16 %v1119, %v1119
    %1125 = vmatprep.subr.bf16.mxu0 %v487
    %1126 = vmatpush1.bf16.msra.mxu0 %v486
    %1127 = vmatprep.subr.bf16.mxu0 %v491
    %1128 = vmatpush1.bf16.msra.mxu0 %v490
    %1129 = vmatprep.subr.bf16.mxu0 %v495
    %1130 = vmatpush1.bf16.msra.mxu0 %v494
    %1131 = vmatprep.subr.bf16.mxu0 %v499
    %1132 = vmatpush1.bf16.msra.mxu0 %v498
    %1133 = vmatprep.subr.bf16.mxu0 %v503
    %1134 = vmatpush1.bf16.msra.mxu0 %v502
    %1135 = vmatprep.subr.bf16.mxu0 %v507
    %1136 = vmatpush1.bf16.msra.mxu0 %v506
    %1137 = vmatprep.subr.bf16.mxu0 %v511
    %1138 = vmatpush1.bf16.msra.mxu0 %v510
    %1139 = vmatprep.subr.bf16.mxu0 %v515
    %1140 = vmatpush1.bf16.msra.mxu0 %v514
    %1141 = vmatprep.subr.bf16.mxu0 0
    %1142 = vmatpush1.bf16.msra.mxu0 0
    %1143 = vmatprep.subr.bf16.mxu0 0
    %1144 = vmatpush1.bf16.msra.mxu0 0
    %1145 = vmatprep.subr.bf16.mxu0 0
    %1146 = vmatpush1.bf16.msra.mxu0 0
    %1147 = vmatprep.subr.bf16.mxu0 0
    %1148 = vmatpush1.bf16.msra.mxu0 0
    %1149 = vmatprep.subr.bf16.mxu0 0
    %1150 = vmatpush1.bf16.msra.mxu0 0
    %1151 = vmatprep.subr.bf16.mxu0 0
    %1152 = vmatpush1.bf16.msra.mxu0 0
    %1153 = vmatprep.subr.bf16.mxu0 0
    %1154 = vmatpush1.bf16.msra.mxu0 0
    %1155 = vmatprep.subr.bf16.mxu0 0
    %1156 = vmatpush1.bf16.msra.mxu0 0
    %1157 = vmatprep.mubr.bf16.mxu0 0
    %1158 = vmatmul.mubr.bf16.gmra.mrb[0].mxu0 %v1124
    %v1159 = vpop.f32.mrb[0].mxu0
    %v1160 = vadd.f32 0.0, %v1159
    %v1161 = vpop.f32.mrb[0].mxu0
    %v1162 = vadd.f32 0.0, %v1161
    %v1163 = vpop.f32.mrb[0].mxu0
    %v1164 = vpop.f32.mrb[0].mxu0
    %1165 = vdwg.mxu0
    %1166 = vmatprep.subr.bf16.mxu0 %v489
    %1167 = vmatpush1.bf16.msra.mxu0 %v488
    %1168 = vmatprep.subr.bf16.mxu0 %v493
    %1169 = vmatpush1.bf16.msra.mxu0 %v492
    %1170 = vmatprep.subr.bf16.mxu0 %v497
    %1171 = vmatpush1.bf16.msra.mxu0 %v496
    %1172 = vmatprep.subr.bf16.mxu0 %v501
    %1173 = vmatpush1.bf16.msra.mxu0 %v500
    %1174 = vmatprep.subr.bf16.mxu0 %v505
    %1175 = vmatpush1.bf16.msra.mxu0 %v504
    %1176 = vmatprep.subr.bf16.mxu0 %v509
    %1177 = vmatpush1.bf16.msra.mxu0 %v508
    %1178 = vmatprep.subr.bf16.mxu0 %v513
    %1179 = vmatpush1.bf16.msra.mxu0 %v512
    %1180 = vmatprep.subr.bf16.mxu0 %v517
    %1181 = vmatpush1.bf16.msra.mxu0 %v516
    %1182 = vmatprep.subr.bf16.mxu0 0
    %1183 = vmatpush1.bf16.msra.mxu0 0
    %1184 = vmatprep.subr.bf16.mxu0 0
    %1185 = vmatpush1.bf16.msra.mxu0 0
    %1186 = vmatprep.subr.bf16.mxu0 0
    %1187 = vmatpush1.bf16.msra.mxu0 0
    %1188 = vmatprep.subr.bf16.mxu0 0
    %1189 = vmatpush1.bf16.msra.mxu0 0
    %1190 = vmatprep.subr.bf16.mxu0 0
    %1191 = vmatpush1.bf16.msra.mxu0 0
    %1192 = vmatprep.subr.bf16.mxu0 0
    %1193 = vmatpush1.bf16.msra.mxu0 0
    %1194 = vmatprep.subr.bf16.mxu0 0
    %1195 = vmatpush1.bf16.msra.mxu0 0
    %1196 = vmatprep.subr.bf16.mxu0 0
    %1197 = vmatpush1.bf16.msra.mxu0 0
    %1198 = vmatprep.mubr.bf16.mxu0 0
    %1199 = vmatmul.mubr.bf16.gmra.mrb[0].mxu0 %v1124
    %v1200 = vpop.f32.mrb[0].mxu0
    %v1201 = vadd.f32 0.0, %v1200
    %v1202 = vpop.f32.mrb[0].mxu0
    %v1203 = vadd.f32 0.0, %v1202
    %v1204 = vpop.f32.mrb[0].mxu0
    %v1205 = vpop.f32.mrb[0].mxu0
    %1206 = vdwg.mxu0
    %v1207 = vadd.f32 %v1120, %v1160
    %v1208 = vadd.f32 %v1121, %v1162
    %v1209 = vadd.f32 %v1122, %v1201
    %v1210 = vadd.f32 %v1123, %v1203
    %v1211 = vxor.u32 %v1207, 2147483648
    %v1212 = vxor.u32 %v1208, 2147483648
    %v1213 = vxor.u32 %v1209, 2147483648
    %v1214 = vmul.f32 %v1211, 1.442695
    %v1215 = vpow.pop %v1214
    %v1216 = vmul.f32 %v1212, 1.442695
    %v1217 = vpow.pop %v1216
    %v1218 = vmul.f32 %v1213, 1.442695
    %v1219 = vpow.pop %v1218
    %v1220 = vadd.f32 %v1215, 1.0
    %v1221 = vadd.f32 %v1217, 1.0
    %v1222 = vadd.f32 %v1219, 1.0
    %v1223 = vrcp.pop %v1220
    %v1224 = vmul.f32 1.0, %v1223
    %v1225 = vrcp.pop %v1221
    %v1226 = vmul.f32 1.0, %v1225
    %v1227 = vrcp.pop %v1222
    %v1228 = vmul.f32 1.0, %v1227
    %v1229 = vtanh.pop %v1210
    %v1230 = vmul.f32 %v1226, %v1117
    %v1231 = vmul.f32 %v1224, %v1229
    %v1232 = vadd.f32 %v1230, %v1231
    %v1233 = vtanh.pop %v1232
    %v1234 = vmul.f32 %v1228, %v1233
    %v1235 = vsel %vm382, %v216, %v190
    %v1236 = vsel %vm383, %v218, %v192
    %v1237 = vsel %vm384, %v289, %v263
    %v1238 = vsel %vm385, %v291, %v265
    %v1239 = vpack.c.bf16 %v1234, %v1234
    %1240 = vmatprep.subr.bf16.mxu0 %v487
    %1241 = vmatpush1.bf16.msra.mxu0 %v486
    %1242 = vmatprep.subr.bf16.mxu0 %v491
    %1243 = vmatpush1.bf16.msra.mxu0 %v490
    %1244 = vmatprep.subr.bf16.mxu0 %v495
    %1245 = vmatpush1.bf16.msra.mxu0 %v494
    %1246 = vmatprep.subr.bf16.mxu0 %v499
    %1247 = vmatpush1.bf16.msra.mxu0 %v498
    %1248 = vmatprep.subr.bf16.mxu0 %v503
    %1249 = vmatpush1.bf16.msra.mxu0 %v502
    %1250 = vmatprep.subr.bf16.mxu0 %v507
    %1251 = vmatpush1.bf16.msra.mxu0 %v506
    %1252 = vmatprep.subr.bf16.mxu0 %v511
    %1253 = vmatpush1.bf16.msra.mxu0 %v510
    %1254 = vmatprep.subr.bf16.mxu0 %v515
    %1255 = vmatpush1.bf16.msra.mxu0 %v514
    %1256 = vmatprep.subr.bf16.mxu0 0
    %1257 = vmatpush1.bf16.msra.mxu0 0
    %1258 = vmatprep.subr.bf16.mxu0 0
    %1259 = vmatpush1.bf16.msra.mxu0 0
    %1260 = vmatprep.subr.bf16.mxu0 0
    %1261 = vmatpush1.bf16.msra.mxu0 0
    %1262 = vmatprep.subr.bf16.mxu0 0
    %1263 = vmatpush1.bf16.msra.mxu0 0
    %1264 = vmatprep.subr.bf16.mxu0 0
    %1265 = vmatpush1.bf16.msra.mxu0 0
    %1266 = vmatprep.subr.bf16.mxu0 0
    %1267 = vmatpush1.bf16.msra.mxu0 0
    %1268 = vmatprep.subr.bf16.mxu0 0
    %1269 = vmatpush1.bf16.msra.mxu0 0
    %1270 = vmatprep.subr.bf16.mxu0 0
    %1271 = vmatpush1.bf16.msra.mxu0 0
    %1272 = vmatprep.mubr.bf16.mxu0 0
    %1273 = vmatmul.mubr.bf16.gmra.mrb[0].mxu0 %v1239
    %v1274 = vpop.f32.mrb[0].mxu0
    %v1275 = vadd.f32 0.0, %v1274
    %v1276 = vpop.f32.mrb[0].mxu0
    %v1277 = vadd.f32 0.0, %v1276
    %v1278 = vpop.f32.mrb[0].mxu0
    %v1279 = vpop.f32.mrb[0].mxu0
    %1280 = vdwg.mxu0
    %1281 = vmatprep.subr.bf16.mxu0 %v489
    %1282 = vmatpush1.bf16.msra.mxu0 %v488
    %1283 = vmatprep.subr.bf16.mxu0 %v493
    %1284 = vmatpush1.bf16.msra.mxu0 %v492
    %1285 = vmatprep.subr.bf16.mxu0 %v497
    %1286 = vmatpush1.bf16.msra.mxu0 %v496
    %1287 = vmatprep.subr.bf16.mxu0 %v501
    %1288 = vmatpush1.bf16.msra.mxu0 %v500
    %1289 = vmatprep.subr.bf16.mxu0 %v505
    %1290 = vmatpush1.bf16.msra.mxu0 %v504
    %1291 = vmatprep.subr.bf16.mxu0 %v509
    %1292 = vmatpush1.bf16.msra.mxu0 %v508
    %1293 = vmatprep.subr.bf16.mxu0 %v513
    %1294 = vmatpush1.bf16.msra.mxu0 %v512
    %1295 = vmatprep.subr.bf16.mxu0 %v517
    %1296 = vmatpush1.bf16.msra.mxu0 %v516
    %1297 = vmatprep.subr.bf16.mxu0 0
    %1298 = vmatpush1.bf16.msra.mxu0 0
    %1299 = vmatprep.subr.bf16.mxu0 0
    %1300 = vmatpush1.bf16.msra.mxu0 0
    %1301 = vmatprep.subr.bf16.mxu0 0
    %1302 = vmatpush1.bf16.msra.mxu0 0
    %1303 = vmatprep.subr.bf16.mxu0 0
    %1304 = vmatpush1.bf16.msra.mxu0 0
    %1305 = vmatprep.subr.bf16.mxu0 0
    %1306 = vmatpush1.bf16.msra.mxu0 0
    %1307 = vmatprep.subr.bf16.mxu0 0
    %1308 = vmatpush1.bf16.msra.mxu0 0
    %1309 = vmatprep.subr.bf16.mxu0 0
    %1310 = vmatpush1.bf16.msra.mxu0 0
    %1311 = vmatprep.subr.bf16.mxu0 0
    %1312 = vmatpush1.bf16.msra.mxu0 0
    %1313 = vmatprep.mubr.bf16.mxu0 0
    %1314 = vmatmul.mubr.bf16.gmra.mrb[0].mxu0 %v1239
    %v1315 = vpop.f32.mrb[0].mxu0
    %v1316 = vadd.f32 0.0, %v1315
    %v1317 = vpop.f32.mrb[0].mxu0
    %v1318 = vadd.f32 0.0, %v1317
    %v1319 = vpop.f32.mrb[0].mxu0
    %v1320 = vpop.f32.mrb[0].mxu0
    %1321 = vdwg.mxu0
    %v1322 = vadd.f32 %v1235, %v1275
    %v1323 = vadd.f32 %v1236, %v1277
    %v1324 = vadd.f32 %v1237, %v1316
    %v1325 = vadd.f32 %v1238, %v1318
    %v1326 = vxor.u32 %v1322, 2147483648
    %v1327 = vxor.u32 %v1323, 2147483648
    %v1328 = vxor.u32 %v1324, 2147483648
    %v1329 = vmul.f32 %v1326, 1.442695
    %v1330 = vpow.pop %v1329
    %v1331 = vmul.f32 %v1327, 1.442695
    %v1332 = vpow.pop %v1331
    %v1333 = vmul.f32 %v1328, 1.442695
    %v1334 = vpow.pop %v1333
    %v1335 = vadd.f32 %v1330, 1.0
    %v1336 = vadd.f32 %v1332, 1.0
    %v1337 = vadd.f32 %v1334, 1.0
    %v1338 = vrcp.pop %v1335
    %v1339 = vmul.f32 1.0, %v1338
    %v1340 = vrcp.pop %v1336
    %v1341 = vmul.f32 1.0, %v1340
    %v1342 = vrcp.pop %v1337
    %v1343 = vmul.f32 1.0, %v1342
    %v1344 = vtanh.pop %v1325
    %v1345 = vmul.f32 %v1341, %v1232
    %v1346 = vmul.f32 %v1339, %v1344
    %v1347 = vadd.f32 %v1345, %v1346
    %v1348 = vtanh.pop %v1347
    %v1349 = vmul.f32 %v1343, %v1348
    %v1350 = vsel %vm382, %v220, %v186
    %v1351 = vsel %vm383, %v222, %v188
    %v1352 = vsel %vm384, %v293, %v259
    %v1353 = vsel %vm385, %v295, %v261
    %v1354 = vpack.c.bf16 %v1349, %v1349
    %1355 = vmatprep.subr.bf16.mxu0 %v487
    %1356 = vmatpush1.bf16.msra.mxu0 %v486
    %1357 = vmatprep.subr.bf16.mxu0 %v491
    %1358 = vmatpush1.bf16.msra.mxu0 %v490
    %1359 = vmatprep.subr.bf16.mxu0 %v495
    %1360 = vmatpush1.bf16.msra.mxu0 %v494
    %1361 = vmatprep.subr.bf16.mxu0 %v499
    %1362 = vmatpush1.bf16.msra.mxu0 %v498
    %1363 = vmatprep.subr.bf16.mxu0 %v503
    %1364 = vmatpush1.bf16.msra.mxu0 %v502
    %1365 = vmatprep.subr.bf16.mxu0 %v507
    %1366 = vmatpush1.bf16.msra.mxu0 %v506
    %1367 = vmatprep.subr.bf16.mxu0 %v511
    %1368 = vmatpush1.bf16.msra.mxu0 %v510
    %1369 = vmatprep.subr.bf16.mxu0 %v515
    %1370 = vmatpush1.bf16.msra.mxu0 %v514
    %1371 = vmatprep.subr.bf16.mxu0 0
    %1372 = vmatpush1.bf16.msra.mxu0 0
    %1373 = vmatprep.subr.bf16.mxu0 0
    %1374 = vmatpush1.bf16.msra.mxu0 0
    %1375 = vmatprep.subr.bf16.mxu0 0
    %1376 = vmatpush1.bf16.msra.mxu0 0
    %1377 = vmatprep.subr.bf16.mxu0 0
    %1378 = vmatpush1.bf16.msra.mxu0 0
    %1379 = vmatprep.subr.bf16.mxu0 0
    %1380 = vmatpush1.bf16.msra.mxu0 0
    %1381 = vmatprep.subr.bf16.mxu0 0
    %1382 = vmatpush1.bf16.msra.mxu0 0
    %1383 = vmatprep.subr.bf16.mxu0 0
    %1384 = vmatpush1.bf16.msra.mxu0 0
    %1385 = vmatprep.subr.bf16.mxu0 0
    %1386 = vmatpush1.bf16.msra.mxu0 0
    %1387 = vmatprep.mubr.bf16.mxu0 0
    %1388 = vmatmul.mubr.bf16.gmra.mrb[0].mxu0 %v1354
    %v1389 = vpop.f32.mrb[0].mxu0
    %v1390 = vadd.f32 0.0, %v1389
    %v1391 = vpop.f32.mrb[0].mxu0
    %v1392 = vadd.f32 0.0, %v1391
    %v1393 = vpop.f32.mrb[0].mxu0
    %v1394 = vpop.f32.mrb[0].mxu0
    %1395 = vdwg.mxu0
    %1396 = vmatprep.subr.bf16.mxu0 %v489
    %1397 = vmatpush1.bf16.msra.mxu0 %v488
    %1398 = vmatprep.subr.bf16.mxu0 %v493
    %1399 = vmatpush1.bf16.msra.mxu0 %v492
    %1400 = vmatprep.subr.bf16.mxu0 %v497
    %1401 = vmatpush1.bf16.msra.mxu0 %v496
    %1402 = vmatprep.subr.bf16.mxu0 %v501
    %1403 = vmatpush1.bf16.msra.mxu0 %v500
    %1404 = vmatprep.subr.bf16.mxu0 %v505
    %1405 = vmatpush1.bf16.msra.mxu0 %v504
    %1406 = vmatprep.subr.bf16.mxu0 %v509
    %1407 = vmatpush1.bf16.msra.mxu0 %v508
    %1408 = vmatprep.subr.bf16.mxu0 %v513
    %1409 = vmatpush1.bf16.msra.mxu0 %v512
    %1410 = vmatprep.subr.bf16.mxu0 %v517
    %1411 = vmatpush1.bf16.msra.mxu0 %v516
    %1412 = vmatprep.subr.bf16.mxu0 0
    %1413 = vmatpush1.bf16.msra.mxu0 0
    %1414 = vmatprep.subr.bf16.mxu0 0
    %1415 = vmatpush1.bf16.msra.mxu0 0
    %1416 = vmatprep.subr.bf16.mxu0 0
    %1417 = vmatpush1.bf16.msra.mxu0 0
    %1418 = vmatprep.subr.bf16.mxu0 0
    %1419 = vmatpush1.bf16.msra.mxu0 0
    %1420 = vmatprep.subr.bf16.mxu0 0
    %1421 = vmatpush1.bf16.msra.mxu0 0
    %1422 = vmatprep.subr.bf16.mxu0 0
    %1423 = vmatpush1.bf16.msra.mxu0 0
    %1424 = vmatprep.subr.bf16.mxu0 0
    %1425 = vmatpush1.bf16.msra.mxu0 0
    %1426 = vmatprep.subr.bf16.mxu0 0
    %1427 = vmatpush1.bf16.msra.mxu0 0
    %1428 = vmatprep.mubr.bf16.mxu0 0
    %1429 = vmatmul.mubr.bf16.gmra.mrb[0].mxu0 %v1354
    %v1430 = vpop.f32.mrb[0].mxu0
    %v1431 = vadd.f32 0.0, %v1430
    %v1432 = vpop.f32.mrb[0].mxu0
    %v1433 = vadd.f32 0.0, %v1432
    %v1434 = vpop.f32.mrb[0].mxu0
    %v1435 = vpop.f32.mrb[0].mxu0
    %1436 = vdwg.mxu0
    %v1437 = vadd.f32 %v1350, %v1390
    %v1438 = vadd.f32 %v1351, %v1392
    %v1439 = vadd.f32 %v1352, %v1431
    %v1440 = vadd.f32 %v1353, %v1433
    %v1441 = vxor.u32 %v1437, 2147483648
    %v1442 = vxor.u32 %v1438, 2147483648
    %v1443 = vxor.u32 %v1439, 2147483648
    %v1444 = vmul.f32 %v1441, 1.442695
    %v1445 = vpow.pop %v1444
    %v1446 = vmul.f32 %v1442, 1.442695
    %v1447 = vpow.pop %v1446
    %v1448 = vmul.f32 %v1443, 1.442695
    %v1449 = vpow.pop %v1448
    %v1450 = vadd.f32 %v1445, 1.0
    %v1451 = vadd.f32 %v1447, 1.0
    %v1452 = vadd.f32 %v1449, 1.0
    %v1453 = vrcp.pop %v1450
    %v1454 = vmul.f32 1.0, %v1453
    %v1455 = vrcp.pop %v1451
    %v1456 = vmul.f32 1.0, %v1455
    %v1457 = vrcp.pop %v1452
    %v1458 = vmul.f32 1.0, %v1457
    %v1459 = vtanh.pop %v1440
    %v1460 = vmul.f32 %v1456, %v1347
    %v1461 = vmul.f32 %v1454, %v1459
    %v1462 = vadd.f32 %v1460, %v1461
    %v1463 = vtanh.pop %v1462
    %v1464 = vmul.f32 %v1458, %v1463
    %v1465 = vld [vmem:[%s4] sm:$0xff]
    %v1466 = vld [vmem:[%s4 + $0x8] sm:$0xff]
    %v1467 = vld [vmem:[%s4 + $0x10] sm:$0xff]
    %v1468 = vld [vmem:[%s4 + $0x18] sm:$0xff]
    %v1469 = vld [vmem:[%s4 + $0x20] sm:$0xff]
    %v1470 = vld [vmem:[%s4 + $0x28] sm:$0xff]
    %v1471 = vld [vmem:[%s4 + $0x30] sm:$0xff]
    %v1472 = vld [vmem:[%s4 + $0x38] sm:$0xff]
    %v1473 = vld [vmem:[%s4 + $0x40] sm:$0xff]
    %v1474 = vld [vmem:[%s4 + $0x48] sm:$0xff]
    %v1475 = vld [vmem:[%s4 + $0x50] sm:$0xff]
    %v1476 = vld [vmem:[%s4 + $0x58] sm:$0xff]
    %v1477 = vld [vmem:[%s4 + $0x60] sm:$0xff]
    %v1478 = vld [vmem:[%s4 + $0x68] sm:$0xff]
    %v1479 = vld [vmem:[%s4 + $0x70] sm:$0xff]
    %v1480 = vld [vmem:[%s4 + $0x78] sm:$0xff]
    %v1481 = vld [vmem:[#allocation2] sm:$0x1]
    %v1483 = vlaneseq
    %v1484 = vshrl.u32 %v1483, 7
    %v1485 = vsub.s32 0, %v1484
    %v1486 = vrot.slane %v1481, %v1485
    %1488 = vmatprep.subr.mxu0 0.0
    %1489 = vmatpush1.msra.mxu0 %v1465
    %1490 = vmatprep.subr.mxu0 0.0
    %1491 = vmatpush1.msra.mxu0 %v1466
    %1492 = vmatprep.subr.mxu0 0.0
    %1493 = vmatpush1.msra.mxu0 %v1467
    %1494 = vmatprep.subr.mxu0 0.0
    %1495 = vmatpush1.msra.mxu0 %v1468
    %1496 = vmatprep.subr.mxu0 0.0
    %1497 = vmatpush1.msra.mxu0 %v1469
    %1498 = vmatprep.subr.mxu0 0.0
    %1499 = vmatpush1.msra.mxu0 %v1470
    %1500 = vmatprep.subr.mxu0 0.0
    %1501 = vmatpush1.msra.mxu0 %v1471
    %1502 = vmatprep.subr.mxu0 0.0
    %1503 = vmatpush1.msra.mxu0 %v1472
    %1504 = vmatprep.subr.mxu0 0.0
    %1505 = vmatpush1.msra.mxu0 %v1473
    %1506 = vmatprep.subr.mxu0 0.0
    %1507 = vmatpush1.msra.mxu0 %v1474
    %1508 = vmatprep.subr.mxu0 0.0
    %1509 = vmatpush1.msra.mxu0 %v1475
    %1510 = vmatprep.subr.mxu0 0.0
    %1511 = vmatpush1.msra.mxu0 %v1476
    %1512 = vmatprep.subr.mxu0 0.0
    %1513 = vmatpush1.msra.mxu0 %v1477
    %1514 = vmatprep.subr.mxu0 0.0
    %1515 = vmatpush1.msra.mxu0 %v1478
    %1516 = vmatprep.subr.mxu0 0.0
    %1517 = vmatpush1.msra.mxu0 %v1479
    %1518 = vmatprep.subr.mxu0 0.0
    %1519 = vmatpush1.msra.mxu0 %v1480
    %1520 = vmatprep.subr.mxu0 0.0
    %1521 = vmatpush1.msra.mxu0 0.0
    %1522 = vmatprep.subr.mxu0 0.0
    %1523 = vmatpush1.msra.mxu0 0.0
    %1524 = vmatprep.subr.mxu0 0.0
    %1525 = vmatpush1.msra.mxu0 0.0
    %1526 = vmatprep.subr.mxu0 0.0
    %1527 = vmatpush1.msra.mxu0 0.0
    %1528 = vmatprep.subr.mxu0 0.0
    %1529 = vmatpush1.msra.mxu0 0.0
    %1530 = vmatprep.subr.mxu0 0.0
    %1531 = vmatpush1.msra.mxu0 0.0
    %1532 = vmatprep.subr.mxu0 0.0
    %1533 = vmatpush1.msra.mxu0 0.0
    %1534 = vmatprep.subr.mxu0 0.0
    %1535 = vmatpush1.msra.mxu0 0.0
    %1536 = vmatprep.subr.mxu0 0.0
    %1537 = vmatpush1.msra.mxu0 0.0
    %1538 = vmatprep.subr.mxu0 0.0
    %1539 = vmatpush1.msra.mxu0 0.0
    %1540 = vmatprep.subr.mxu0 0.0
    %1541 = vmatpush1.msra.mxu0 0.0
    %1542 = vmatprep.subr.mxu0 0.0
    %1543 = vmatpush1.msra.mxu0 0.0
    %1544 = vmatprep.subr.mxu0 0.0
    %1545 = vmatpush1.msra.mxu0 0.0
    %1546 = vmatprep.subr.mxu0 0.0
    %1547 = vmatpush1.msra.mxu0 0.0
    %1548 = vmatprep.subr.mxu0 0.0
    %1549 = vmatpush1.msra.mxu0 0.0
    %1550 = vmatprep.subr.mxu0 0.0
    %1551 = vmatpush1.msra.mxu0 0.0
    %1552 = vmatprep.mubr.f32.mxu0 0.0
    %1553 = vmatmul.mubr.f32.gmra.mrb[0].mxu0 %v1464
    %v1554 = vpop.f32.mrb[0].mxu0
    %v1555 = vadd.f32 %v1486, %v1554
    %v1556 = vpop.f32.mrb[0].mxu0
    %1557 = vdwg.mxu0
    %v1558 = vxor.u32 %v1555, 2147483648
    %v1559 = vmul.f32 %v1558, 1.442695
    %v1560 = vpow.pop %v1559
    %v1561 = vadd.f32 %v1560, 1.0
    %v1562 = vrcp.pop %v1561
    %v1563 = vmul.f32 1.0, %v1562
    %vm1564 = vcmask 7168
    %1565 = vst.msk [vmem:[%s6] sm:$0xff] %vm1564, %v1563
    // Predicated region
    $region30: #{tpu_custom_call.1} parent=1 // pred_check
      _
    $region31: #{tpu_custom_call.1} parent=1 // pred_check_branch
      %1567 = sbr.rel (0) target = $region33
    $region32: #{tpu_custom_call.1} parent=1 // pred_region
      _
    $region33: #{tpu_custom_call.1} parent=1 // pred_fallthru
      _
    // Predicated region
    $region34: #{tpu_custom_call.1} parent=1 // pred_check
      _
    $region35: #{tpu_custom_call.1} parent=1 // pred_check_branch
      %1569 = sbr.rel (0) target = $region37
    $region36: #{tpu_custom_call.1} parent=1 // pred_region
      _
    $region37: #{tpu_custom_call.1} parent=1 // pred_fallthru
      _
    %1570 = vsyncpa [#allocation4], 1

</llo_original>
